<compile_context>
chip_gen: v6e
topology: v6e:2x2x1
jax: 0.10.0
libtpu: 0.0.40
codegen_flags: <defaults>
</compile_context>

<pallas_src>
import functools

import jax
import jax.numpy as jnp
from jax import lax
from jax.experimental import pallas as pl
from jax.experimental.pallas import tpu as pltpu


# -----------------------------------------------------------------------------
# LSTM path (default architecture)
# -----------------------------------------------------------------------------
def _lstm_kernel(x_ref, wih_ref, whh_ref, b_ref, wcls_ref, bcls_ref, out_ref,
                 *, batch, seq_len):
    H4 = wih_ref.shape[0]                      # w_ih: (4H, D) native PyTorch layout
    H = H4 // 4

    # Hoisted input projection: ONE MXU matmul over all T*B rows (time-major).
    # x_ref: (T*B, D); contract last dims of both operands (NT matmul, no transposes).
    xproj = lax.dot_general(
        x_ref[...], wih_ref[...],
        dimension_numbers=(((1,), (1,)), ((), ())),
        preferred_element_type=jnp.float32)    # (T*B, 4H)
    xproj = xproj + b_ref[...]                 # fused (b_ih + b_hh)
    xproj = xproj.reshape(seq_len, batch, H4)  # time-major: xproj[t] is contiguous

    whh = whh_ref[...]                         # (4H, H) native layout
    h = jnp.zeros((batch, H), jnp.float32)
    c = jnp.zeros((batch, H), jnp.float32)

    # Serial recurrence, fully unrolled (seq_len is small and static).  Only the tiny
    # (B,H) x (H,4H) contraction + pointwise gate math remain on the critical path.
    for t in range(seq_len):
        gates = xproj[t] + lax.dot_general(
            h, whh,
            dimension_numbers=(((1,), (1,)), ((), ())),
            preferred_element_type=jnp.float32)          # (B, 4H)
        # Two full-width transcendentals per step (instead of four sliced ones).
        sig = jax.nn.sigmoid(gates)                      # (B, 4H) — one vreg
        th = jnp.tanh(gates)                             # (B, 4H) — one vreg
        i = sig[:, 0 * H:1 * H]
        f = sig[:, 1 * H:2 * H]
        g = th[:, 2 * H:3 * H]
        o = sig[:, 3 * H:4 * H]
        c = f * c + i * g
        h = o * jnp.tanh(c)

    # Classifier Linear(H, 1): VPU mul + lane reduce (1-wide MXU result is wasteful).
    logits = jnp.sum(h * wcls_ref[...], axis=-1, keepdims=True) + bcls_ref[0]
    out_ref[...] = logits.astype(out_ref.dtype)


def detector_lstm_forward(x, w_ih, w_hh, b_ih, b_hh, w_cls, b_cls):
    """x: (B, T, D) float32 (batch_first, like PyTorch). Returns (B, 1)."""
    B, T, D = x.shape
    H4 = w_ih.shape[0]

    # Time-major layout so the kernel's per-step slice is a contiguous sublane read.
    x_tm = jnp.swapaxes(x, 0, 1).reshape(T * B, D)       # (T*B, D)
    b = (b_ih + b_hh).reshape(1, H4)                     # fused LSTM bias
    b_cls1 = b_cls.reshape(1)

    kernel = functools.partial(_lstm_kernel, batch=B, seq_len=T)
    vmem = pl.BlockSpec(memory_space=pltpu.MemorySpace.VMEM)
    smem = pl.BlockSpec(memory_space=pltpu.MemorySpace.SMEM)

    return pl.pallas_call(
        kernel,
        out_shape=jax.ShapeDtypeStruct((B, 1), jnp.float32),
        in_specs=[vmem, vmem, vmem, vmem, vmem, smem],
        out_specs=vmem,
    )(x_tm, w_ih, w_hh, b, w_cls, b_cls1)


# -----------------------------------------------------------------------------
# MLP path (architecture == 'mlp')
# -----------------------------------------------------------------------------
def _mlp_kernel(x_ref, w1_ref, b1_ref, wcls_ref, bcls_ref, out_ref):
    # Linear(8000, H) in f32: w1 consumed in its native (H, 8000) layout by contracting
    # the last dims of both operands.  (bf16 would only help if the weight were
    # pre-cast once at parameter-load time; a per-call cast costs MORE HBM traffic.)
    h = lax.dot_general(
        x_ref[...], w1_ref[...],
        dimension_numbers=(((1,), (1,)), ((), ())),
        preferred_element_type=jnp.float32) + b1_ref[...]
    h = jnp.maximum(h, 0.0)                    # ReLU
    # Dropout(0.5) is identity at inference.
    # TODO(synk): training-mode stochastic dropout (pltpu.prng_*) not implemented.
    logits = jnp.sum(h * wcls_ref[...], axis=-1, keepdims=True) + bcls_ref[0]
    out_ref[...] = logits.astype(out_ref.dtype)


def detector_mlp_forward(x, w1, b1, w_cls, b_cls):
    """x: (B, ...) reshaped to (B, 8000). Returns (B, 1)."""
    B = x.shape[0]
    x2 = x.reshape(B, -1)                      # (B, 8000), contiguous reshape
    H = w1.shape[0]                            # w1: (H, 8000) native layout

    b1_2d = b1.reshape(1, H)
    b_cls1 = b_cls.reshape(1)

    vmem = pl.BlockSpec(memory_space=pltpu.MemorySpace.VMEM)
    smem = pl.BlockSpec(memory_space=pltpu.MemorySpace.SMEM)

    return pl.pallas_call(
        _mlp_kernel,
        out_shape=jax.ShapeDtypeStruct((B, 1), jnp.float32),
        in_specs=[vmem, vmem, vmem, vmem, smem],
        out_specs=vmem,
    )(x2, w1, b1_2d, w_cls, b_cls1)


# -----------------------------------------------------------------------------
# Pure-JAX references (module semantics, f32)
# -----------------------------------------------------------------------------
def lstm_ref(x, w_ih, w_hh, b_ih, b_hh, w_cls, b_cls):
    B, T, D = x.shape
    H = w_hh.shape[1]

    def step(carry, x_t):
        h, c = carry
        gates = x_t @ w_ih.T + b_ih + h @ w_hh.T + b_hh
        i, f, g, o = jnp.split(gates, 4, axis=-1)
        i, f, o = jax.nn.sigmoid(i), jax.nn.sigmoid(f), jax.nn.sigmoid(o)
        g = jnp.tanh(g)
        c = f * c + i * g
        h = o * jnp.tanh(c)
        return (h, c), None

    (h, _), _ = lax.scan(step,
                         (jnp.zeros((B, H), jnp.float32),
                          jnp.zeros((B, H), jnp.float32)),
                         jnp.swapaxes(x, 0, 1))
    return h @ w_cls.T + b_cls


def mlp_ref(x, w1, b1, w_cls, b_cls):
    h = jnp.maximum(x.reshape(x.shape[0], -1) @ w1.T + b1, 0.0)
    return h @ w_cls.T + b_cls


# -----------------------------------------------------------------------------
if __name__ == "__main__":
    # D=500 is fixed by the module; T=16 so the MLP reshape gives 16*500 = 8000 features.
    B, T, D, H = 2, 16, 500, 32

    key = jax.random.PRNGKey(0)
    keys = jax.random.split(key, 10)
    s = 1.0 / jnp.sqrt(jnp.float32(H))

    x = jax.random.normal(keys[0], (B, T, D), dtype=jnp.float32)

    # LSTM parameters (PyTorch shapes, gate order i,f,g,o)
    w_ih = jax.random.uniform(keys[1], (4 * H, D), jnp.float32, -s, s)
    w_hh = jax.random.uniform(keys[2], (4 * H, H), jnp.float32, -s, s)
    b_ih = jax.random.uniform(keys[3], (4 * H,), jnp.float32, -s, s)
    b_hh = jax.random.uniform(keys[4], (4 * H,), jnp.float32, -s, s)

    # classifier Linear(H, 1)
    w_cls = jax.random.uniform(keys[5], (1, H), jnp.float32, -s, s)
    b_cls = jax.random.uniform(keys[6], (1,), jnp.float32, -s, s)

    # MLP parameters Linear(8000, H)
    s_mlp = 1.0 / jnp.sqrt(jnp.float32(T * D))
    w1 = jax.random.uniform(keys[7], (H, T * D), jnp.float32, -s_mlp, s_mlp)
    b1 = jax.random.uniform(keys[8], (H,), jnp.float32, -s_mlp, s_mlp)

    # ---- LSTM path (default architecture) ----
    out_lstm = jax.block_until_ready(
        detector_lstm_forward(x, w_ih, w_hh, b_ih, b_hh, w_cls, b_cls))
    ref_lstm = lstm_ref(x, w_ih, w_hh, b_ih, b_hh, w_cls, b_cls)
    assert out_lstm.shape == (B, 1)
    assert jnp.allclose(out_lstm, ref_lstm, rtol=1e-3, atol=1e-3), \
        f"LSTM mismatch: {out_lstm} vs {ref_lstm}"

    # ---- MLP path (architecture='mlp') ----
    out_mlp = jax.block_until_ready(detector_mlp_forward(x, w1, b1, w_cls, b_cls))
    ref_mlp = mlp_ref(x, w1, b1, w_cls, b_cls)
    assert out_mlp.shape == (B, 1)
    assert jnp.allclose(out_mlp, ref_mlp, rtol=1e-3, atol=1e-3), \
        f"MLP mismatch: {out_mlp} vs {ref_mlp}"

    print("KERNEL_OK")
</pallas_src>

<mosaic_0001>
module attributes {stable_mosaic.version = 11 : i64} {
  func.func @_lstm_kernel(%arg0: memref<32x500xf32, #tpu.memory_space<vmem>>, %arg1: memref<128x500xf32, #tpu.memory_space<vmem>>, %arg2: memref<128x32xf32, #tpu.memory_space<vmem>>, %arg3: memref<1x128xf32, #tpu.memory_space<vmem>>, %arg4: memref<1x32xf32, #tpu.memory_space<vmem>>, %arg5: memref<1xf32, #tpu.memory_space<smem>>, %arg6: memref<2x1xf32, #tpu.memory_space<vmem>>) attributes {dimension_semantics = [], scalar_prefetch = 0 : i64, scratch_operands = 0 : i64, tpu.core_type = #tpu.core_type<tc>} {
    %c0 = arith.constant 0 : index
    %c0_0 = arith.constant 0 : index
    %0 = vector.load %arg0[%c0, %c0_0] : memref<32x500xf32, #tpu.memory_space<vmem>>, vector<32x500xf32>
    %c0_1 = arith.constant 0 : index
    %c0_2 = arith.constant 0 : index
    %1 = vector.load %arg1[%c0_1, %c0_2] : memref<128x500xf32, #tpu.memory_space<vmem>>, vector<128x500xf32>
    %cst = arith.constant dense<0.000000e+00> : vector<32x128xf32>
    %2 = tpu.matmul %0, %1, %cst {dimension_numbers = #tpu.dot_dimension_numbers<[1], [1], [0], [0], [0, 0, 1, 0], [], []>} : vector<32x500xf32>, vector<128x500xf32>, vector<32x128xf32> -> vector<32x128xf32>
    %c0_3 = arith.constant 0 : index
    %c0_4 = arith.constant 0 : index
    %3 = vector.load %arg3[%c0_3, %c0_4] : memref<1x128xf32, #tpu.memory_space<vmem>>, vector<1x128xf32>
    %4 = vector.broadcast %3 : vector<1x128xf32> to vector<32x128xf32>
    %5 = arith.addf %2, %4 : vector<32x128xf32>
    %6 = vector.shape_cast %5 : vector<32x128xf32> to vector<16x2x128xf32>
    %c0_5 = arith.constant 0 : index
    %c0_6 = arith.constant 0 : index
    %7 = vector.load %arg2[%c0_5, %c0_6] : memref<128x32xf32, #tpu.memory_space<vmem>>, vector<128x32xf32>
    %cst_7 = arith.constant 0.000000e+00 : f32
    %8 = vector.broadcast %cst_7 : f32 to vector<2x32xf32>
    %cst_8 = arith.constant 0.000000e+00 : f32
    %9 = vector.broadcast %cst_8 : f32 to vector<2x32xf32>
    %10 = vector.extract_strided_slice %6 {offsets = [0, 0, 0], sizes = [1, 2, 128], strides = [1, 1, 1]} : vector<16x2x128xf32> to vector<1x2x128xf32>
    %11 = vector.shape_cast %10 : vector<1x2x128xf32> to vector<2x128xf32>
    %cst_9 = arith.constant dense<0.000000e+00> : vector<2x128xf32>
    %12 = tpu.matmul %8, %7, %cst_9 {dimension_numbers = #tpu.dot_dimension_numbers<[1], [1], [0], [0], [0, 0, 1, 0], [], []>} : vector<2x32xf32>, vector<128x32xf32>, vector<2x128xf32> -> vector<2x128xf32>
    %13 = arith.addf %11, %12 : vector<2x128xf32>
    %14 = arith.negf %13 : vector<2x128xf32>
    %15 = math.exp %14 : vector<2x128xf32>
    %cst_10 = arith.constant 1.000000e+00 : f32
    %16 = vector.broadcast %cst_10 : f32 to vector<2x128xf32>
    %17 = arith.addf %16, %15 : vector<2x128xf32>
    %18 = arith.divf %16, %17 : vector<2x128xf32>
    %19 = math.tanh %13 : vector<2x128xf32>
    %20 = vector.extract_strided_slice %18 {offsets = [0, 0], sizes = [2, 32], strides = [1, 1]} : vector<2x128xf32> to vector<2x32xf32>
    %21 = vector.extract_strided_slice %18 {offsets = [0, 32], sizes = [2, 32], strides = [1, 1]} : vector<2x128xf32> to vector<2x32xf32>
    %22 = vector.extract_strided_slice %19 {offsets = [0, 64], sizes = [2, 32], strides = [1, 1]} : vector<2x128xf32> to vector<2x32xf32>
    %23 = vector.extract_strided_slice %18 {offsets = [0, 96], sizes = [2, 32], strides = [1, 1]} : vector<2x128xf32> to vector<2x32xf32>
    %24 = arith.mulf %21, %9 : vector<2x32xf32>
    %25 = arith.mulf %20, %22 : vector<2x32xf32>
    %26 = arith.addf %24, %25 : vector<2x32xf32>
    %27 = math.tanh %26 : vector<2x32xf32>
    %28 = arith.mulf %23, %27 : vector<2x32xf32>
    %29 = vector.extract_strided_slice %6 {offsets = [1, 0, 0], sizes = [1, 2, 128], strides = [1, 1, 1]} : vector<16x2x128xf32> to vector<1x2x128xf32>
    %30 = vector.shape_cast %29 : vector<1x2x128xf32> to vector<2x128xf32>
    %cst_11 = arith.constant dense<0.000000e+00> : vector<2x128xf32>
    %31 = tpu.matmul %28, %7, %cst_11 {dimension_numbers = #tpu.dot_dimension_numbers<[1], [1], [0], [0], [0, 0, 1, 0], [], []>} : vector<2x32xf32>, vector<128x32xf32>, vector<2x128xf32> -> vector<2x128xf32>
    %32 = arith.addf %30, %31 : vector<2x128xf32>
    %33 = arith.negf %32 : vector<2x128xf32>
    %34 = math.exp %33 : vector<2x128xf32>
    %cst_12 = arith.constant 1.000000e+00 : f32
    %35 = vector.broadcast %cst_12 : f32 to vector<2x128xf32>
    %36 = arith.addf %35, %34 : vector<2x128xf32>
    %37 = arith.divf %35, %36 : vector<2x128xf32>
    %38 = math.tanh %32 : vector<2x128xf32>
    %39 = vector.extract_strided_slice %37 {offsets = [0, 0], sizes = [2, 32], strides = [1, 1]} : vector<2x128xf32> to vector<2x32xf32>
    %40 = vector.extract_strided_slice %37 {offsets = [0, 32], sizes = [2, 32], strides = [1, 1]} : vector<2x128xf32> to vector<2x32xf32>
    %41 = vector.extract_strided_slice %38 {offsets = [0, 64], sizes = [2, 32], strides = [1, 1]} : vector<2x128xf32> to vector<2x32xf32>
    %42 = vector.extract_strided_slice %37 {offsets = [0, 96], sizes = [2, 32], strides = [1, 1]} : vector<2x128xf32> to vector<2x32xf32>
    %43 = arith.mulf %40, %26 : vector<2x32xf32>
    %44 = arith.mulf %39, %41 : vector<2x32xf32>
    %45 = arith.addf %43, %44 : vector<2x32xf32>
    %46 = math.tanh %45 : vector<2x32xf32>
    %47 = arith.mulf %42, %46 : vector<2x32xf32>
    %48 = vector.extract_strided_slice %6 {offsets = [2, 0, 0], sizes = [1, 2, 128], strides = [1, 1, 1]} : vector<16x2x128xf32> to vector<1x2x128xf32>
    %49 = vector.shape_cast %48 : vector<1x2x128xf32> to vector<2x128xf32>
    %cst_13 = arith.constant dense<0.000000e+00> : vector<2x128xf32>
    %50 = tpu.matmul %47, %7, %cst_13 {dimension_numbers = #tpu.dot_dimension_numbers<[1], [1], [0], [0], [0, 0, 1, 0], [], []>} : vector<2x32xf32>, vector<128x32xf32>, vector<2x128xf32> -> vector<2x128xf32>
    %51 = arith.addf %49, %50 : vector<2x128xf32>
    %52 = arith.negf %51 : vector<2x128xf32>
    %53 = math.exp %52 : vector<2x128xf32>
    %cst_14 = arith.constant 1.000000e+00 : f32
    %54 = vector.broadcast %cst_14 : f32 to vector<2x128xf32>
    %55 = arith.addf %54, %53 : vector<2x128xf32>
    %56 = arith.divf %54, %55 : vector<2x128xf32>
    %57 = math.tanh %51 : vector<2x128xf32>
    %58 = vector.extract_strided_slice %56 {offsets = [0, 0], sizes = [2, 32], strides = [1, 1]} : vector<2x128xf32> to vector<2x32xf32>
    %59 = vector.extract_strided_slice %56 {offsets = [0, 32], sizes = [2, 32], strides = [1, 1]} : vector<2x128xf32> to vector<2x32xf32>
    %60 = vector.extract_strided_slice %57 {offsets = [0, 64], sizes = [2, 32], strides = [1, 1]} : vector<2x128xf32> to vector<2x32xf32>
    %61 = vector.extract_strided_slice %56 {offsets = [0, 96], sizes = [2, 32], strides = [1, 1]} : vector<2x128xf32> to vector<2x32xf32>
    %62 = arith.mulf %59, %45 : vector<2x32xf32>
    %63 = arith.mulf %58, %60 : vector<2x32xf32>
    %64 = arith.addf %62, %63 : vector<2x32xf32>
    %65 = math.tanh %64 : vector<2x32xf32>
    %66 = arith.mulf %61, %65 : vector<2x32xf32>
    %67 = vector.extract_strided_slice %6 {offsets = [3, 0, 0], sizes = [1, 2, 128], strides = [1, 1, 1]} : vector<16x2x128xf32> to vector<1x2x128xf32>
    %68 = vector.shape_cast %67 : vector<1x2x128xf32> to vector<2x128xf32>
    %cst_15 = arith.constant dense<0.000000e+00> : vector<2x128xf32>
    %69 = tpu.matmul %66, %7, %cst_15 {dimension_numbers = #tpu.dot_dimension_numbers<[1], [1], [0], [0], [0, 0, 1, 0], [], []>} : vector<2x32xf32>, vector<128x32xf32>, vector<2x128xf32> -> vector<2x128xf32>
    %70 = arith.addf %68, %69 : vector<2x128xf32>
    %71 = arith.negf %70 : vector<2x128xf32>
    %72 = math.exp %71 : vector<2x128xf32>
    %cst_16 = arith.constant 1.000000e+00 : f32
    %73 = vector.broadcast %cst_16 : f32 to vector<2x128xf32>
    %74 = arith.addf %73, %72 : vector<2x128xf32>
    %75 = arith.divf %73, %74 : vector<2x128xf32>
    %76 = math.tanh %70 : vector<2x128xf32>
    %77 = vector.extract_strided_slice %75 {offsets = [0, 0], sizes = [2, 32], strides = [1, 1]} : vector<2x128xf32> to vector<2x32xf32>
    %78 = vector.extract_strided_slice %75 {offsets = [0, 32], sizes = [2, 32], strides = [1, 1]} : vector<2x128xf32> to vector<2x32xf32>
    %79 = vector.extract_strided_slice %76 {offsets = [0, 64], sizes = [2, 32], strides = [1, 1]} : vector<2x128xf32> to vector<2x32xf32>
    %80 = vector.extract_strided_slice %75 {offsets = [0, 96], sizes = [2, 32], strides = [1, 1]} : vector<2x128xf32> to vector<2x32xf32>
    %81 = arith.mulf %78, %64 : vector<2x32xf32>
    %82 = arith.mulf %77, %79 : vector<2x32xf32>
    %83 = arith.addf %81, %82 : vector<2x32xf32>
    %84 = math.tanh %83 : vector<2x32xf32>
    %85 = arith.mulf %80, %84 : vector<2x32xf32>
    %86 = vector.extract_strided_slice %6 {offsets = [4, 0, 0], sizes = [1, 2, 128], strides = [1, 1, 1]} : vector<16x2x128xf32> to vector<1x2x128xf32>
    %87 = vector.shape_cast %86 : vector<1x2x128xf32> to vector<2x128xf32>
    %cst_17 = arith.constant dense<0.000000e+00> : vector<2x128xf32>
    %88 = tpu.matmul %85, %7, %cst_17 {dimension_numbers = #tpu.dot_dimension_numbers<[1], [1], [0], [0], [0, 0, 1, 0], [], []>} : vector<2x32xf32>, vector<128x32xf32>, vector<2x128xf32> -> vector<2x128xf32>
    %89 = arith.addf %87, %88 : vector<2x128xf32>
    %90 = arith.negf %89 : vector<2x128xf32>
    %91 = math.exp %90 : vector<2x128xf32>
    %cst_18 = arith.constant 1.000000e+00 : f32
    %92 = vector.broadcast %cst_18 : f32 to vector<2x128xf32>
    %93 = arith.addf %92, %91 : vector<2x128xf32>
    %94 = arith.divf %92, %93 : vector<2x128xf32>
    %95 = math.tanh %89 : vector<2x128xf32>
    %96 = vector.extract_strided_slice %94 {offsets = [0, 0], sizes = [2, 32], strides = [1, 1]} : vector<2x128xf32> to vector<2x32xf32>
    %97 = vector.extract_strided_slice %94 {offsets = [0, 32], sizes = [2, 32], strides = [1, 1]} : vector<2x128xf32> to vector<2x32xf32>
    %98 = vector.extract_strided_slice %95 {offsets = [0, 64], sizes = [2, 32], strides = [1, 1]} : vector<2x128xf32> to vector<2x32xf32>
    %99 = vector.extract_strided_slice %94 {offsets = [0, 96], sizes = [2, 32], strides = [1, 1]} : vector<2x128xf32> to vector<2x32xf32>
    %100 = arith.mulf %97, %83 : vector<2x32xf32>
    %101 = arith.mulf %96, %98 : vector<2x32xf32>
    %102 = arith.addf %100, %101 : vector<2x32xf32>
    %103 = math.tanh %102 : vector<2x32xf32>
    %104 = arith.mulf %99, %103 : vector<2x32xf32>
    %105 = vector.extract_strided_slice %6 {offsets = [5, 0, 0], sizes = [1, 2, 128], strides = [1, 1, 1]} : vector<16x2x128xf32> to vector<1x2x128xf32>
    %106 = vector.shape_cast %105 : vector<1x2x128xf32> to vector<2x128xf32>
    %cst_19 = arith.constant dense<0.000000e+00> : vector<2x128xf32>
    %107 = tpu.matmul %104, %7, %cst_19 {dimension_numbers = #tpu.dot_dimension_numbers<[1], [1], [0], [0], [0, 0, 1, 0], [], []>} : vector<2x32xf32>, vector<128x32xf32>, vector<2x128xf32> -> vector<2x128xf32>
    %108 = arith.addf %106, %107 : vector<2x128xf32>
    %109 = arith.negf %108 : vector<2x128xf32>
    %110 = math.exp %109 : vector<2x128xf32>
    %cst_20 = arith.constant 1.000000e+00 : f32
    %111 = vector.broadcast %cst_20 : f32 to vector<2x128xf32>
    %112 = arith.addf %111, %110 : vector<2x128xf32>
    %113 = arith.divf %111, %112 : vector<2x128xf32>
    %114 = math.tanh %108 : vector<2x128xf32>
    %115 = vector.extract_strided_slice %113 {offsets = [0, 0], sizes = [2, 32], strides = [1, 1]} : vector<2x128xf32> to vector<2x32xf32>
    %116 = vector.extract_strided_slice %113 {offsets = [0, 32], sizes = [2, 32], strides = [1, 1]} : vector<2x128xf32> to vector<2x32xf32>
    %117 = vector.extract_strided_slice %114 {offsets = [0, 64], sizes = [2, 32], strides = [1, 1]} : vector<2x128xf32> to vector<2x32xf32>
    %118 = vector.extract_strided_slice %113 {offsets = [0, 96], sizes = [2, 32], strides = [1, 1]} : vector<2x128xf32> to vector<2x32xf32>
    %119 = arith.mulf %116, %102 : vector<2x32xf32>
    %120 = arith.mulf %115, %117 : vector<2x32xf32>
    %121 = arith.addf %119, %120 : vector<2x32xf32>
    %122 = math.tanh %121 : vector<2x32xf32>
    %123 = arith.mulf %118, %122 : vector<2x32xf32>
    %124 = vector.extract_strided_slice %6 {offsets = [6, 0, 0], sizes = [1, 2, 128], strides = [1, 1, 1]} : vector<16x2x128xf32> to vector<1x2x128xf32>
    %125 = vector.shape_cast %124 : vector<1x2x128xf32> to vector<2x128xf32>
    %cst_21 = arith.constant dense<0.000000e+00> : vector<2x128xf32>
    %126 = tpu.matmul %123, %7, %cst_21 {dimension_numbers = #tpu.dot_dimension_numbers<[1], [1], [0], [0], [0, 0, 1, 0], [], []>} : vector<2x32xf32>, vector<128x32xf32>, vector<2x128xf32> -> vector<2x128xf32>
    %127 = arith.addf %125, %126 : vector<2x128xf32>
    %128 = arith.negf %127 : vector<2x128xf32>
    %129 = math.exp %128 : vector<2x128xf32>
    %cst_22 = arith.constant 1.000000e+00 : f32
    %130 = vector.broadcast %cst_22 : f32 to vector<2x128xf32>
    %131 = arith.addf %130, %129 : vector<2x128xf32>
    %132 = arith.divf %130, %131 : vector<2x128xf32>
    %133 = math.tanh %127 : vector<2x128xf32>
    %134 = vector.extract_strided_slice %132 {offsets = [0, 0], sizes = [2, 32], strides = [1, 1]} : vector<2x128xf32> to vector<2x32xf32>
    %135 = vector.extract_strided_slice %132 {offsets = [0, 32], sizes = [2, 32], strides = [1, 1]} : vector<2x128xf32> to vector<2x32xf32>
    %136 = vector.extract_strided_slice %133 {offsets = [0, 64], sizes = [2, 32], strides = [1, 1]} : vector<2x128xf32> to vector<2x32xf32>
    %137 = vector.extract_strided_slice %132 {offsets = [0, 96], sizes = [2, 32], strides = [1, 1]} : vector<2x128xf32> to vector<2x32xf32>
    %138 = arith.mulf %135, %121 : vector<2x32xf32>
    %139 = arith.mulf %134, %136 : vector<2x32xf32>
    %140 = arith.addf %138, %139 : vector<2x32xf32>
    %141 = math.tanh %140 : vector<2x32xf32>
    %142 = arith.mulf %137, %141 : vector<2x32xf32>
    %143 = vector.extract_strided_slice %6 {offsets = [7, 0, 0], sizes = [1, 2, 128], strides = [1, 1, 1]} : vector<16x2x128xf32> to vector<1x2x128xf32>
    %144 = vector.shape_cast %143 : vector<1x2x128xf32> to vector<2x128xf32>
    %cst_23 = arith.constant dense<0.000000e+00> : vector<2x128xf32>
    %145 = tpu.matmul %142, %7, %cst_23 {dimension_numbers = #tpu.dot_dimension_numbers<[1], [1], [0], [0], [0, 0, 1, 0], [], []>} : vector<2x32xf32>, vector<128x32xf32>, vector<2x128xf32> -> vector<2x128xf32>
    %146 = arith.addf %144, %145 : vector<2x128xf32>
    %147 = arith.negf %146 : vector<2x128xf32>
    %148 = math.exp %147 : vector<2x128xf32>
    %cst_24 = arith.constant 1.000000e+00 : f32
    %149 = vector.broadcast %cst_24 : f32 to vector<2x128xf32>
    %150 = arith.addf %149, %148 : vector<2x128xf32>
    %151 = arith.divf %149, %150 : vector<2x128xf32>
    %152 = math.tanh %146 : vector<2x128xf32>
    %153 = vector.extract_strided_slice %151 {offsets = [0, 0], sizes = [2, 32], strides = [1, 1]} : vector<2x128xf32> to vector<2x32xf32>
    %154 = vector.extract_strided_slice %151 {offsets = [0, 32], sizes = [2, 32], strides = [1, 1]} : vector<2x128xf32> to vector<2x32xf32>
    %155 = vector.extract_strided_slice %152 {offsets = [0, 64], sizes = [2, 32], strides = [1, 1]} : vector<2x128xf32> to vector<2x32xf32>
    %156 = vector.extract_strided_slice %151 {offsets = [0, 96], sizes = [2, 32], strides = [1, 1]} : vector<2x128xf32> to vector<2x32xf32>
    %157 = arith.mulf %154, %140 : vector<2x32xf32>
    %158 = arith.mulf %153, %155 : vector<2x32xf32>
    %159 = arith.addf %157, %158 : vector<2x32xf32>
    %160 = math.tanh %159 : vector<2x32xf32>
    %161 = arith.mulf %156, %160 : vector<2x32xf32>
    %162 = vector.extract_strided_slice %6 {offsets = [8, 0, 0], sizes = [1, 2, 128], strides = [1, 1, 1]} : vector<16x2x128xf32> to vector<1x2x128xf32>
    %163 = vector.shape_cast %162 : vector<1x2x128xf32> to vector<2x128xf32>
    %cst_25 = arith.constant dense<0.000000e+00> : vector<2x128xf32>
    %164 = tpu.matmul %161, %7, %cst_25 {dimension_numbers = #tpu.dot_dimension_numbers<[1], [1], [0], [0], [0, 0, 1, 0], [], []>} : vector<2x32xf32>, vector<128x32xf32>, vector<2x128xf32> -> vector<2x128xf32>
    %165 = arith.addf %163, %164 : vector<2x128xf32>
    %166 = arith.negf %165 : vector<2x128xf32>
    %167 = math.exp %166 : vector<2x128xf32>
    %cst_26 = arith.constant 1.000000e+00 : f32
    %168 = vector.broadcast %cst_26 : f32 to vector<2x128xf32>
    %169 = arith.addf %168, %167 : vector<2x128xf32>
    %170 = arith.divf %168, %169 : vector<2x128xf32>
    %171 = math.tanh %165 : vector<2x128xf32>
    %172 = vector.extract_strided_slice %170 {offsets = [0, 0], sizes = [2, 32], strides = [1, 1]} : vector<2x128xf32> to vector<2x32xf32>
    %173 = vector.extract_strided_slice %170 {offsets = [0, 32], sizes = [2, 32], strides = [1, 1]} : vector<2x128xf32> to vector<2x32xf32>
    %174 = vector.extract_strided_slice %171 {offsets = [0, 64], sizes = [2, 32], strides = [1, 1]} : vector<2x128xf32> to vector<2x32xf32>
    %175 = vector.extract_strided_slice %170 {offsets = [0, 96], sizes = [2, 32], strides = [1, 1]} : vector<2x128xf32> to vector<2x32xf32>
    %176 = arith.mulf %173, %159 : vector<2x32xf32>
    %177 = arith.mulf %172, %174 : vector<2x32xf32>
    %178 = arith.addf %176, %177 : vector<2x32xf32>
    %179 = math.tanh %178 : vector<2x32xf32>
    %180 = arith.mulf %175, %179 : vector<2x32xf32>
    %181 = vector.extract_strided_slice %6 {offsets = [9, 0, 0], sizes = [1, 2, 128], strides = [1, 1, 1]} : vector<16x2x128xf32> to vector<1x2x128xf32>
    %182 = vector.shape_cast %181 : vector<1x2x128xf32> to vector<2x128xf32>
    %cst_27 = arith.constant dense<0.000000e+00> : vector<2x128xf32>
    %183 = tpu.matmul %180, %7, %cst_27 {dimension_numbers = #tpu.dot_dimension_numbers<[1], [1], [0], [0], [0, 0, 1, 0], [], []>} : vector<2x32xf32>, vector<128x32xf32>, vector<2x128xf32> -> vector<2x128xf32>
    %184 = arith.addf %182, %183 : vector<2x128xf32>
    %185 = arith.negf %184 : vector<2x128xf32>
    %186 = math.exp %185 : vector<2x128xf32>
    %cst_28 = arith.constant 1.000000e+00 : f32
    %187 = vector.broadcast %cst_28 : f32 to vector<2x128xf32>
    %188 = arith.addf %187, %186 : vector<2x128xf32>
    %189 = arith.divf %187, %188 : vector<2x128xf32>
    %190 = math.tanh %184 : vector<2x128xf32>
    %191 = vector.extract_strided_slice %189 {offsets = [0, 0], sizes = [2, 32], strides = [1, 1]} : vector<2x128xf32> to vector<2x32xf32>
    %192 = vector.extract_strided_slice %189 {offsets = [0, 32], sizes = [2, 32], strides = [1, 1]} : vector<2x128xf32> to vector<2x32xf32>
    %193 = vector.extract_strided_slice %190 {offsets = [0, 64], sizes = [2, 32], strides = [1, 1]} : vector<2x128xf32> to vector<2x32xf32>
    %194 = vector.extract_strided_slice %189 {offsets = [0, 96], sizes = [2, 32], strides = [1, 1]} : vector<2x128xf32> to vector<2x32xf32>
    %195 = arith.mulf %192, %178 : vector<2x32xf32>
    %196 = arith.mulf %191, %193 : vector<2x32xf32>
    %197 = arith.addf %195, %196 : vector<2x32xf32>
    %198 = math.tanh %197 : vector<2x32xf32>
    %199 = arith.mulf %194, %198 : vector<2x32xf32>
    %200 = vector.extract_strided_slice %6 {offsets = [10, 0, 0], sizes = [1, 2, 128], strides = [1, 1, 1]} : vector<16x2x128xf32> to vector<1x2x128xf32>
    %201 = vector.shape_cast %200 : vector<1x2x128xf32> to vector<2x128xf32>
    %cst_29 = arith.constant dense<0.000000e+00> : vector<2x128xf32>
    %202 = tpu.matmul %199, %7, %cst_29 {dimension_numbers = #tpu.dot_dimension_numbers<[1], [1], [0], [0], [0, 0, 1, 0], [], []>} : vector<2x32xf32>, vector<128x32xf32>, vector<2x128xf32> -> vector<2x128xf32>
    %203 = arith.addf %201, %202 : vector<2x128xf32>
    %204 = arith.negf %203 : vector<2x128xf32>
    %205 = math.exp %204 : vector<2x128xf32>
    %cst_30 = arith.constant 1.000000e+00 : f32
    %206 = vector.broadcast %cst_30 : f32 to vector<2x128xf32>
    %207 = arith.addf %206, %205 : vector<2x128xf32>
    %208 = arith.divf %206, %207 : vector<2x128xf32>
    %209 = math.tanh %203 : vector<2x128xf32>
    %210 = vector.extract_strided_slice %208 {offsets = [0, 0], sizes = [2, 32], strides = [1, 1]} : vector<2x128xf32> to vector<2x32xf32>
    %211 = vector.extract_strided_slice %208 {offsets = [0, 32], sizes = [2, 32], strides = [1, 1]} : vector<2x128xf32> to vector<2x32xf32>
    %212 = vector.extract_strided_slice %209 {offsets = [0, 64], sizes = [2, 32], strides = [1, 1]} : vector<2x128xf32> to vector<2x32xf32>
    %213 = vector.extract_strided_slice %208 {offsets = [0, 96], sizes = [2, 32], strides = [1, 1]} : vector<2x128xf32> to vector<2x32xf32>
    %214 = arith.mulf %211, %197 : vector<2x32xf32>
    %215 = arith.mulf %210, %212 : vector<2x32xf32>
    %216 = arith.addf %214, %215 : vector<2x32xf32>
    %217 = math.tanh %216 : vector<2x32xf32>
    %218 = arith.mulf %213, %217 : vector<2x32xf32>
    %219 = vector.extract_strided_slice %6 {offsets = [11, 0, 0], sizes = [1, 2, 128], strides = [1, 1, 1]} : vector<16x2x128xf32> to vector<1x2x128xf32>
    %220 = vector.shape_cast %219 : vector<1x2x128xf32> to vector<2x128xf32>
    %cst_31 = arith.constant dense<0.000000e+00> : vector<2x128xf32>
    %221 = tpu.matmul %218, %7, %cst_31 {dimension_numbers = #tpu.dot_dimension_numbers<[1], [1], [0], [0], [0, 0, 1, 0], [], []>} : vector<2x32xf32>, vector<128x32xf32>, vector<2x128xf32> -> vector<2x128xf32>
    %222 = arith.addf %220, %221 : vector<2x128xf32>
    %223 = arith.negf %222 : vector<2x128xf32>
    %224 = math.exp %223 : vector<2x128xf32>
    %cst_32 = arith.constant 1.000000e+00 : f32
    %225 = vector.broadcast %cst_32 : f32 to vector<2x128xf32>
    %226 = arith.addf %225, %224 : vector<2x128xf32>
    %227 = arith.divf %225, %226 : vector<2x128xf32>
    %228 = math.tanh %222 : vector<2x128xf32>
    %229 = vector.extract_strided_slice %227 {offsets = [0, 0], sizes = [2, 32], strides = [1, 1]} : vector<2x128xf32> to vector<2x32xf32>
    %230 = vector.extract_strided_slice %227 {offsets = [0, 32], sizes = [2, 32], strides = [1, 1]} : vector<2x128xf32> to vector<2x32xf32>
    %231 = vector.extract_strided_slice %228 {offsets = [0, 64], sizes = [2, 32], strides = [1, 1]} : vector<2x128xf32> to vector<2x32xf32>
    %232 = vector.extract_strided_slice %227 {offsets = [0, 96], sizes = [2, 32], strides = [1, 1]} : vector<2x128xf32> to vector<2x32xf32>
    %233 = arith.mulf %230, %216 : vector<2x32xf32>
    %234 = arith.mulf %229, %231 : vector<2x32xf32>
    %235 = arith.addf %233, %234 : vector<2x32xf32>
    %236 = math.tanh %235 : vector<2x32xf32>
    %237 = arith.mulf %232, %236 : vector<2x32xf32>
    %238 = vector.extract_strided_slice %6 {offsets = [12, 0, 0], sizes = [1, 2, 128], strides = [1, 1, 1]} : vector<16x2x128xf32> to vector<1x2x128xf32>
    %239 = vector.shape_cast %238 : vector<1x2x128xf32> to vector<2x128xf32>
    %cst_33 = arith.constant dense<0.000000e+00> : vector<2x128xf32>
    %240 = tpu.matmul %237, %7, %cst_33 {dimension_numbers = #tpu.dot_dimension_numbers<[1], [1], [0], [0], [0, 0, 1, 0], [], []>} : vector<2x32xf32>, vector<128x32xf32>, vector<2x128xf32> -> vector<2x128xf32>
    %241 = arith.addf %239, %240 : vector<2x128xf32>
    %242 = arith.negf %241 : vector<2x128xf32>
    %243 = math.exp %242 : vector<2x128xf32>
    %cst_34 = arith.constant 1.000000e+00 : f32
    %244 = vector.broadcast %cst_34 : f32 to vector<2x128xf32>
    %245 = arith.addf %244, %243 : vector<2x128xf32>
    %246 = arith.divf %244, %245 : vector<2x128xf32>
    %247 = math.tanh %241 : vector<2x128xf32>
    %248 = vector.extract_strided_slice %246 {offsets = [0, 0], sizes = [2, 32], strides = [1, 1]} : vector<2x128xf32> to vector<2x32xf32>
    %249 = vector.extract_strided_slice %246 {offsets = [0, 32], sizes = [2, 32], strides = [1, 1]} : vector<2x128xf32> to vector<2x32xf32>
    %250 = vector.extract_strided_slice %247 {offsets = [0, 64], sizes = [2, 32], strides = [1, 1]} : vector<2x128xf32> to vector<2x32xf32>
    %251 = vector.extract_strided_slice %246 {offsets = [0, 96], sizes = [2, 32], strides = [1, 1]} : vector<2x128xf32> to vector<2x32xf32>
    %252 = arith.mulf %249, %235 : vector<2x32xf32>
    %253 = arith.mulf %248, %250 : vector<2x32xf32>
    %254 = arith.addf %252, %253 : vector<2x32xf32>
    %255 = math.tanh %254 : vector<2x32xf32>
    %256 = arith.mulf %251, %255 : vector<2x32xf32>
    %257 = vector.extract_strided_slice %6 {offsets = [13, 0, 0], sizes = [1, 2, 128], strides = [1, 1, 1]} : vector<16x2x128xf32> to vector<1x2x128xf32>
    %258 = vector.shape_cast %257 : vector<1x2x128xf32> to vector<2x128xf32>
    %cst_35 = arith.constant dense<0.000000e+00> : vector<2x128xf32>
    %259 = tpu.matmul %256, %7, %cst_35 {dimension_numbers = #tpu.dot_dimension_numbers<[1], [1], [0], [0], [0, 0, 1, 0], [], []>} : vector<2x32xf32>, vector<128x32xf32>, vector<2x128xf32> -> vector<2x128xf32>
    %260 = arith.addf %258, %259 : vector<2x128xf32>
    %261 = arith.negf %260 : vector<2x128xf32>
    %262 = math.exp %261 : vector<2x128xf32>
    %cst_36 = arith.constant 1.000000e+00 : f32
    %263 = vector.broadcast %cst_36 : f32 to vector<2x128xf32>
    %264 = arith.addf %263, %262 : vector<2x128xf32>
    %265 = arith.divf %263, %264 : vector<2x128xf32>
    %266 = math.tanh %260 : vector<2x128xf32>
    %267 = vector.extract_strided_slice %265 {offsets = [0, 0], sizes = [2, 32], strides = [1, 1]} : vector<2x128xf32> to vector<2x32xf32>
    %268 = vector.extract_strided_slice %265 {offsets = [0, 32], sizes = [2, 32], strides = [1, 1]} : vector<2x128xf32> to vector<2x32xf32>
    %269 = vector.extract_strided_slice %266 {offsets = [0, 64], sizes = [2, 32], strides = [1, 1]} : vector<2x128xf32> to vector<2x32xf32>
    %270 = vector.extract_strided_slice %265 {offsets = [0, 96], sizes = [2, 32], strides = [1, 1]} : vector<2x128xf32> to vector<2x32xf32>
    %271 = arith.mulf %268, %254 : vector<2x32xf32>
    %272 = arith.mulf %267, %269 : vector<2x32xf32>
    %273 = arith.addf %271, %272 : vector<2x32xf32>
    %274 = math.tanh %273 : vector<2x32xf32>
    %275 = arith.mulf %270, %274 : vector<2x32xf32>
    %276 = vector.extract_strided_slice %6 {offsets = [14, 0, 0], sizes = [1, 2, 128], strides = [1, 1, 1]} : vector<16x2x128xf32> to vector<1x2x128xf32>
    %277 = vector.shape_cast %276 : vector<1x2x128xf32> to vector<2x128xf32>
    %cst_37 = arith.constant dense<0.000000e+00> : vector<2x128xf32>
    %278 = tpu.matmul %275, %7, %cst_37 {dimension_numbers = #tpu.dot_dimension_numbers<[1], [1], [0], [0], [0, 0, 1, 0], [], []>} : vector<2x32xf32>, vector<128x32xf32>, vector<2x128xf32> -> vector<2x128xf32>
    %279 = arith.addf %277, %278 : vector<2x128xf32>
    %280 = arith.negf %279 : vector<2x128xf32>
    %281 = math.exp %280 : vector<2x128xf32>
    %cst_38 = arith.constant 1.000000e+00 : f32
    %282 = vector.broadcast %cst_38 : f32 to vector<2x128xf32>
    %283 = arith.addf %282, %281 : vector<2x128xf32>
    %284 = arith.divf %282, %283 : vector<2x128xf32>
    %285 = math.tanh %279 : vector<2x128xf32>
    %286 = vector.extract_strided_slice %284 {offsets = [0, 0], sizes = [2, 32], strides = [1, 1]} : vector<2x128xf32> to vector<2x32xf32>
    %287 = vector.extract_strided_slice %284 {offsets = [0, 32], sizes = [2, 32], strides = [1, 1]} : vector<2x128xf32> to vector<2x32xf32>
    %288 = vector.extract_strided_slice %285 {offsets = [0, 64], sizes = [2, 32], strides = [1, 1]} : vector<2x128xf32> to vector<2x32xf32>
    %289 = vector.extract_strided_slice %284 {offsets = [0, 96], sizes = [2, 32], strides = [1, 1]} : vector<2x128xf32> to vector<2x32xf32>
    %290 = arith.mulf %287, %273 : vector<2x32xf32>
    %291 = arith.mulf %286, %288 : vector<2x32xf32>
    %292 = arith.addf %290, %291 : vector<2x32xf32>
    %293 = math.tanh %292 : vector<2x32xf32>
    %294 = arith.mulf %289, %293 : vector<2x32xf32>
    %295 = vector.extract_strided_slice %6 {offsets = [15, 0, 0], sizes = [1, 2, 128], strides = [1, 1, 1]} : vector<16x2x128xf32> to vector<1x2x128xf32>
    %296 = vector.shape_cast %295 : vector<1x2x128xf32> to vector<2x128xf32>
    %cst_39 = arith.constant dense<0.000000e+00> : vector<2x128xf32>
    %297 = tpu.matmul %294, %7, %cst_39 {dimension_numbers = #tpu.dot_dimension_numbers<[1], [1], [0], [0], [0, 0, 1, 0], [], []>} : vector<2x32xf32>, vector<128x32xf32>, vector<2x128xf32> -> vector<2x128xf32>
    %298 = arith.addf %296, %297 : vector<2x128xf32>
    %299 = arith.negf %298 : vector<2x128xf32>
    %300 = math.exp %299 : vector<2x128xf32>
    %cst_40 = arith.constant 1.000000e+00 : f32
    %301 = vector.broadcast %cst_40 : f32 to vector<2x128xf32>
    %302 = arith.addf %301, %300 : vector<2x128xf32>
    %303 = arith.divf %301, %302 : vector<2x128xf32>
    %304 = math.tanh %298 : vector<2x128xf32>
    %305 = vector.extract_strided_slice %303 {offsets = [0, 0], sizes = [2, 32], strides = [1, 1]} : vector<2x128xf32> to vector<2x32xf32>
    %306 = vector.extract_strided_slice %303 {offsets = [0, 32], sizes = [2, 32], strides = [1, 1]} : vector<2x128xf32> to vector<2x32xf32>
    %307 = vector.extract_strided_slice %304 {offsets = [0, 64], sizes = [2, 32], strides = [1, 1]} : vector<2x128xf32> to vector<2x32xf32>
    %308 = vector.extract_strided_slice %303 {offsets = [0, 96], sizes = [2, 32], strides = [1, 1]} : vector<2x128xf32> to vector<2x32xf32>
    %309 = arith.mulf %306, %292 : vector<2x32xf32>
    %310 = arith.mulf %305, %307 : vector<2x32xf32>
    %311 = arith.addf %309, %310 : vector<2x32xf32>
    %312 = math.tanh %311 : vector<2x32xf32>
    %313 = arith.mulf %308, %312 : vector<2x32xf32>
    %c0_41 = arith.constant 0 : index
    %c0_42 = arith.constant 0 : index
    %314 = vector.load %arg4[%c0_41, %c0_42] : memref<1x32xf32, #tpu.memory_space<vmem>>, vector<1x32xf32>
    %315 = vector.broadcast %314 : vector<1x32xf32> to vector<2x32xf32>
    %316 = arith.mulf %313, %315 : vector<2x32xf32>
    %cst_43 = arith.constant dense<0.000000e+00> : vector<2xf32>
    %317 = vector.multi_reduction <add>, %316, %cst_43 [1] : vector<2x32xf32> to vector<2xf32>
    %318 = vector.shape_cast %317 : vector<2xf32> to vector<2x1xf32>
    %c0_44 = arith.constant 0 : index
    %319 = memref.load %arg5[%c0_44] : memref<1xf32, #tpu.memory_space<smem>>
    %320 = vector.broadcast %319 : f32 to vector<2x1xf32>
    %321 = arith.addf %318, %320 : vector<2x1xf32>
    %c0_45 = arith.constant 0 : index
    %c0_46 = arith.constant 0 : index
    %322 = vector.load %arg6[%c0_45, %c0_46] : memref<2x1xf32, #tpu.memory_space<vmem>>, vector<2x1xf32>
    tpu.vector_store %arg6[%c0_45, %c0_46], %321 {strides = array<i32>} : memref<2x1xf32, #tpu.memory_space<vmem>>, vector<2x1xf32>,
    return
  }
}

</mosaic_0001>

<llo_original>
// kernel: tpu_custom_call.1
$region0: #{tpu_custom_call.1}
  #allocation0 [shape = 'u32[]', space=smem, size = 0x4, offset = 0x4, fixed_abs, tag = 'smem constant byte address 0x4 - core index']
  #allocation1 [shape = 'u32[144,128]{1,0:T(1,128)}', space=vmem, size = 0x12000, scoped, tag = 'internal scratch']
  #allocation2 [shape = 'f32[1]{0:T(128)S(6)}', space=smem, size = 0x200, scoped, tag = 'scoped memory for tpu_custom_call.1']
  %s0 = inlined_call_operand.vmem [shape: f32[32,500], index: 0, kind: input, shape index: {}]
  %s1 = inlined_call_operand.vmem [shape: f32[128,500], index: 1, kind: input, shape index: {}]
  %s2 = inlined_call_operand.vmem [shape: f32[128,32], index: 2, kind: input, shape index: {}]
  %s3 = inlined_call_operand.vmem [shape: f32[1,128], index: 3, kind: input, shape index: {}]
  %s4 = inlined_call_operand.vmem [shape: f32[1,32], index: 4, kind: input, shape index: {}]
  %s5 = inlined_call_operand.<no memory space> [shape: f32[1], index: 5, kind: input, shape index: {}]
  %s6 = inlined_call_operand.vmem [shape: f32[2,1], index: 6, kind: output, shape index: {}]
  %s7 = sld [smem:[#allocation0]]
  $region34: #{tpu_custom_call.1} parent=0
    _
  %s9 = ssub.s32 1, %s7
  %s10 = scalar_select 0, %s9, %s7
  %11 = sst [smem:[#allocation2]] %s5
  // Predicated region
  $region2: #{tpu_custom_call.1} parent=0 // pred_check
    _
  $region3: #{tpu_custom_call.1} parent=0 // pred_check_branch
    %13 = sbr.rel (0) target = $region5
  $region4: #{tpu_custom_call.1} parent=0 // pred_region
    _
  $region5: #{tpu_custom_call.1} parent=0 // pred_fallthru
    _
  // Predicated region
  $region6: #{tpu_custom_call.1} parent=0 // pred_check
    _
  $region7: #{tpu_custom_call.1} parent=0 // pred_check_branch
    %15 = sbr.rel (0) target = $region9
  $region8: #{tpu_custom_call.1} parent=0 // pred_region
    _
  $region9: #{tpu_custom_call.1} parent=0 // pred_fallthru
    _
  // Predicated region
  $region10: #{tpu_custom_call.1} parent=0 // pred_check
    _
  $region11: #{tpu_custom_call.1} parent=0 // pred_check_branch
    %17 = sbr.rel (0) target = $region13
  $region12: #{tpu_custom_call.1} parent=0 // pred_region
    _
  $region13: #{tpu_custom_call.1} parent=0 // pred_fallthru
    _
  // Predicated region
  $region14: #{tpu_custom_call.1} parent=0 // pred_check
    _
  $region15: #{tpu_custom_call.1} parent=0 // pred_check_branch
    %19 = sbr.rel (0) target = $region17
  $region16: #{tpu_custom_call.1} parent=0 // pred_region
    _
  $region17: #{tpu_custom_call.1} parent=0 // pred_fallthru
    _
  // Predicated region
  $region18: #{tpu_custom_call.1} parent=0 // pred_check
    _
  $region19: #{tpu_custom_call.1} parent=0 // pred_check_branch
    %21 = sbr.rel (0) target = $region21
  $region20: #{tpu_custom_call.1} parent=0 // pred_region
    _
  $region21: #{tpu_custom_call.1} parent=0 // pred_fallthru
    _
  // Predicated region
  $region22: #{tpu_custom_call.1} parent=0 // pred_check
    _
  $region23: #{tpu_custom_call.1} parent=0 // pred_check_branch
    %23 = sbr.rel (0) target = $region25
  $region24: #{tpu_custom_call.1} parent=0 // pred_region
    _
  $region25: #{tpu_custom_call.1} parent=0 // pred_fallthru
    _
  %v24 = vld [vmem:[%s0] sm:$0xff]
  %v25 = vld [vmem:[%s0 + $0x8] sm:$0xff]
  %v26 = vld [vmem:[%s0 + $0x10] sm:$0xff]
  %v27 = vld [vmem:[%s0 + $0x18] sm:$0xff]
  %v28 = vld [vmem:[%s0 + $0x20] sm:$0xff]
  %v29 = vld [vmem:[%s0 + $0x28] sm:$0xff]
  %v30 = vld [vmem:[%s0 + $0x30] sm:$0xff]
  %v31 = vld [vmem:[%s0 + $0x38] sm:$0xff]
  %v32 = vld [vmem:[%s0 + $0x40] sm:$0xff]
  %v33 = vld [vmem:[%s0 + $0x48] sm:$0xff]
  %v34 = vld [vmem:[%s0 + $0x50] sm:$0xff]
  %v35 = vld [vmem:[%s0 + $0x58] sm:$0xff]
  %v36 = vld [vmem:[%s0 + $0x60] sm:$0xff]
  %v37 = vld [vmem:[%s0 + $0x68] sm:$0xff]
  %v38 = vld [vmem:[%s0 + $0x70] sm:$0xff]
  %v39 = vld [vmem:[%s0 + $0x78] sm:$0xff]
  %v40 = vld [vmem:[%s1] sm:$0xff]
  %v41 = vld [vmem:[%s1 + $0x8] sm:$0xff]
  %v42 = vld [vmem:[%s1 + $0x10] sm:$0xff]
  %v43 = vld [vmem:[%s1 + $0x18] sm:$0xff]
  %v44 = vld [vmem:[%s1 + $0x20] sm:$0xff]
  %v45 = vld [vmem:[%s1 + $0x28] sm:$0xff]
  %v46 = vld [vmem:[%s1 + $0x30] sm:$0xff]
  %v47 = vld [vmem:[%s1 + $0x38] sm:$0xff]
  %v48 = vld [vmem:[%s1 + $0x40] sm:$0xff]
  %v49 = vld [vmem:[%s1 + $0x48] sm:$0xff]
  %v50 = vld [vmem:[%s1 + $0x50] sm:$0xff]
  %v51 = vld [vmem:[%s1 + $0x58] sm:$0xff]
  %v52 = vld [vmem:[%s1 + $0x60] sm:$0xff]
  %v53 = vld [vmem:[%s1 + $0x68] sm:$0xff]
  %v54 = vld [vmem:[%s1 + $0x70] sm:$0xff]
  %v55 = vld [vmem:[%s1 + $0x78] sm:$0xff]
  %v56 = vld [vmem:[%s1 + $0x80] sm:$0xff]
  %v57 = vld [vmem:[%s1 + $0x88] sm:$0xff]
  %v58 = vld [vmem:[%s1 + $0x90] sm:$0xff]
  %v59 = vld [vmem:[%s1 + $0x98] sm:$0xff]
  %v60 = vld [vmem:[%s1 + $0xa0] sm:$0xff]
  %v61 = vld [vmem:[%s1 + $0xa8] sm:$0xff]
  %v62 = vld [vmem:[%s1 + $0xb0] sm:$0xff]
  %v63 = vld [vmem:[%s1 + $0xb8] sm:$0xff]
  %v64 = vld [vmem:[%s1 + $0xc0] sm:$0xff]
  %v65 = vld [vmem:[%s1 + $0xc8] sm:$0xff]
  %v66 = vld [vmem:[%s1 + $0xd0] sm:$0xff]
  %v67 = vld [vmem:[%s1 + $0xd8] sm:$0xff]
  %v68 = vld [vmem:[%s1 + $0xe0] sm:$0xff]
  %v69 = vld [vmem:[%s1 + $0xe8] sm:$0xff]
  %v70 = vld [vmem:[%s1 + $0xf0] sm:$0xff]
  %v71 = vld [vmem:[%s1 + $0xf8] sm:$0xff]
  %v72 = vld [vmem:[%s1 + $0x100] sm:$0xff]
  %v73 = vld [vmem:[%s1 + $0x108] sm:$0xff]
  %v74 = vld [vmem:[%s1 + $0x110] sm:$0xff]
  %v75 = vld [vmem:[%s1 + $0x118] sm:$0xff]
  %v76 = vld [vmem:[%s1 + $0x120] sm:$0xff]
  %v77 = vld [vmem:[%s1 + $0x128] sm:$0xff]
  %v78 = vld [vmem:[%s1 + $0x130] sm:$0xff]
  %v79 = vld [vmem:[%s1 + $0x138] sm:$0xff]
  %v80 = vld [vmem:[%s1 + $0x140] sm:$0xff]
  %v81 = vld [vmem:[%s1 + $0x148] sm:$0xff]
  %v82 = vld [vmem:[%s1 + $0x150] sm:$0xff]
  %v83 = vld [vmem:[%s1 + $0x158] sm:$0xff]
  %v84 = vld [vmem:[%s1 + $0x160] sm:$0xff]
  %v85 = vld [vmem:[%s1 + $0x168] sm:$0xff]
  %v86 = vld [vmem:[%s1 + $0x170] sm:$0xff]
  %v87 = vld [vmem:[%s1 + $0x178] sm:$0xff]
  %v88 = vld [vmem:[%s1 + $0x180] sm:$0xff]
  %v89 = vld [vmem:[%s1 + $0x188] sm:$0xff]
  %v90 = vld [vmem:[%s1 + $0x190] sm:$0xff]
  %v91 = vld [vmem:[%s1 + $0x198] sm:$0xff]
  %v92 = vld [vmem:[%s1 + $0x1a0] sm:$0xff]
  %v93 = vld [vmem:[%s1 + $0x1a8] sm:$0xff]
  %v94 = vld [vmem:[%s1 + $0x1b0] sm:$0xff]
  %v95 = vld [vmem:[%s1 + $0x1b8] sm:$0xff]
  %v96 = vld [vmem:[%s1 + $0x1c0] sm:$0xff]
  %v97 = vld [vmem:[%s1 + $0x1c8] sm:$0xff]
  %v98 = vld [vmem:[%s1 + $0x1d0] sm:$0xff]
  %v99 = vld [vmem:[%s1 + $0x1d8] sm:$0xff]
  %v100 = vld [vmem:[%s1 + $0x1e0] sm:$0xff]
  %v101 = vld [vmem:[%s1 + $0x1e8] sm:$0xff]
  %v102 = vld [vmem:[%s1 + $0x1f0] sm:$0xff]
  %v103 = vld [vmem:[%s1 + $0x1f8] sm:$0xff]
  %v104 = vld [vmem:[%s3] sm:$0x1]
  %v106 = vlaneseq
  %v107 = vshrl.u32 %v106, 7
  %v108 = vsub.s32 0, %v107
  %v109 = vrot.slane %v104, %v108
  %vm111 = vcmask 949248
  %v113 = vsel %vm111, %v27, 0
  %v116 = vsel %vm111, %v31, 0
  %v119 = vsel %vm111, %v35, 0
  %v122 = vsel %vm111, %v39, 0
  %v125 = vsel %vm111, %v43, 0
  %v128 = vsel %vm111, %v47, 0
  %v131 = vsel %vm111, %v51, 0
  %v134 = vsel %vm111, %v55, 0
  %v137 = vsel %vm111, %v59, 0
  %v140 = vsel %vm111, %v63, 0
  %v143 = vsel %vm111, %v67, 0
  %v146 = vsel %vm111, %v71, 0
  %v149 = vsel %vm111, %v75, 0
  %v152 = vsel %vm111, %v79, 0
  %v155 = vsel %vm111, %v83, 0
  %v158 = vsel %vm111, %v87, 0
  %v161 = vsel %vm111, %v91, 0
  %v164 = vsel %vm111, %v95, 0
  %v167 = vsel %vm111, %v99, 0
  %v170 = vsel %vm111, %v103, 0
  %172 = vmatprep.subr.mxu0 %v101
  %173 = vmatpush1.xpose.msra.mxu0 %v100
  %174 = vmatprep.subr.mxu0 %v97
  %175 = vmatpush1.xpose.msra.mxu0 %v96
  %176 = vmatprep.subr.mxu0 %v93
  %177 = vmatpush1.xpose.msra.mxu0 %v92
  %178 = vmatprep.subr.mxu0 %v89
  %179 = vmatpush1.xpose.msra.mxu0 %v88
  %180 = vmatprep.subr.mxu0 %v85
  %181 = vmatpush1.xpose.msra.mxu0 %v84
  %182 = vmatprep.subr.mxu0 %v81
  %183 = vmatpush1.xpose.msra.mxu0 %v80
  %184 = vmatprep.subr.mxu0 %v77
  %185 = vmatpush1.xpose.msra.mxu0 %v76
  %186 = vmatprep.subr.mxu0 %v73
  %187 = vmatpush1.xpose.msra.mxu0 %v72
  %188 = vmatprep.subr.mxu0 %v69
  %189 = vmatpush1.xpose.msra.mxu0 %v68
  %190 = vmatprep.subr.mxu0 %v65
  %191 = vmatpush1.xpose.msra.mxu0 %v64
  %192 = vmatprep.subr.mxu0 %v61
  %193 = vmatpush1.xpose.msra.mxu0 %v60
  %194 = vmatprep.subr.mxu0 %v57
  %195 = vmatpush1.xpose.msra.mxu0 %v56
  %196 = vmatprep.subr.mxu0 %v53
  %197 = vmatpush1.xpose.msra.mxu0 %v52
  %198 = vmatprep.subr.mxu0 %v49
  %199 = vmatpush1.xpose.msra.mxu0 %v48
  %200 = vmatprep.subr.mxu0 %v45
  %201 = vmatpush1.xpose.msra.mxu0 %v44
  %202 = vmatprep.subr.mxu0 %v41
  %203 = vmatpush1.xpose.msra.mxu0 %v40
  %204 = vmatprep.subr.mxu0 0.0
  %205 = vmatpush2.xpose.msra.mxu0 0.0
  %206 = vmatprep.subr.mxu0 0.0
  %207 = vmatpush2.xpose.msra.mxu0 0.0
  %208 = vmatprep.subr.mxu0 0.0
  %209 = vmatpush2.xpose.msra.mxu0 0.0
  %210 = vmatprep.subr.mxu0 0.0
  %211 = vmatpush2.xpose.msra.mxu0 0.0
  %212 = vmatprep.subr.mxu0 0.0
  %213 = vmatpush2.xpose.msra.mxu0 0.0
  %214 = vmatprep.subr.mxu0 0.0
  %215 = vmatpush2.xpose.msra.mxu0 0.0
  %216 = vmatprep.subr.mxu0 0.0
  %217 = vmatpush2.xpose.msra.mxu0 0.0
  %218 = vmatprep.subr.mxu0 0.0
  %219 = vmatpush2.xpose.msra.mxu0 0.0
  %220 = vmatprep.subr.mxu0 0.0
  %221 = vmatpush2.xpose.msra.mxu0 0.0
  %222 = vmatprep.subr.mxu0 0.0
  %223 = vmatpush2.xpose.msra.mxu0 0.0
  %224 = vmatprep.subr.mxu0 0.0
  %225 = vmatpush2.xpose.msra.mxu0 0.0
  %226 = vmatprep.subr.mxu0 0.0
  %227 = vmatpush2.xpose.msra.mxu0 0.0
  %228 = vmatprep.subr.mxu0 0.0
  %229 = vmatpush2.xpose.msra.mxu0 0.0
  %230 = vmatprep.subr.mxu0 0.0
  %231 = vmatpush2.xpose.msra.mxu0 0.0
  %232 = vmatprep.subr.mxu0 0.0
  %233 = vmatpush2.xpose.msra.mxu0 0.0
  %234 = vmatprep.subr.mxu0 0.0
  %235 = vmatpush2.xpose.msra.mxu0 0.0
  %236 = vmatprep.mubr.f32.mxu0 %v25
  %237 = vmatmul.mubr.f32.gmra.mxu0 %v24
  %v238 = vpop.f32.mrf.mxu0
  %v239 = vadd.f32 %v109, %v238
  %v240 = vpop.f32.mrf.mxu0
  %241 = vmatprep.mubr.f32.mxu0 %v29
  %242 = vmatmul.mubr.f32.gmra.mxu0 %v28
  %v243 = vpop.f32.mrf.mxu0
  %v244 = vadd.f32 %v109, %v243
  %v245 = vpop.f32.mrf.mxu0
  %246 = vmatprep.mubr.f32.mxu0 %v33
  %247 = vmatmul.mubr.f32.gmra.mxu0 %v32
  %v248 = vpop.f32.mrf.mxu0
  %v249 = vadd.f32 %v109, %v248
  %v250 = vpop.f32.mrf.mxu0
  %251 = vmatprep.mubr.f32.mxu0 %v37
  %252 = vmatmul.mubr.f32.gmra.mxu0 %v36
  %v253 = vpop.f32.mrf.mxu0
  %v254 = vadd.f32 %v109, %v253
  %v255 = vpop.f32.mrf.mxu0
  %256 = vdwg.mxu0
  %257 = vmatprep.subr.mxu0 %v170
  %258 = vmatpush1.xpose.msra.mxu0 %v102
  %259 = vmatprep.subr.mxu0 %v167
  %260 = vmatpush1.xpose.msra.mxu0 %v98
  %261 = vmatprep.subr.mxu0 %v164
  %262 = vmatpush1.xpose.msra.mxu0 %v94
  %263 = vmatprep.subr.mxu0 %v161
  %264 = vmatpush1.xpose.msra.mxu0 %v90
  %265 = vmatprep.subr.mxu0 %v158
  %266 = vmatpush1.xpose.msra.mxu0 %v86
  %267 = vmatprep.subr.mxu0 %v155
  %268 = vmatpush1.xpose.msra.mxu0 %v82
  %269 = vmatprep.subr.mxu0 %v152
  %270 = vmatpush1.xpose.msra.mxu0 %v78
  %271 = vmatprep.subr.mxu0 %v149
  %272 = vmatpush1.xpose.msra.mxu0 %v74
  %273 = vmatprep.subr.mxu0 %v146
  %274 = vmatpush1.xpose.msra.mxu0 %v70
  %275 = vmatprep.subr.mxu0 %v143
  %276 = vmatpush1.xpose.msra.mxu0 %v66
  %277 = vmatprep.subr.mxu0 %v140
  %278 = vmatpush1.xpose.msra.mxu0 %v62
  %279 = vmatprep.subr.mxu0 %v137
  %280 = vmatpush1.xpose.msra.mxu0 %v58
  %281 = vmatprep.subr.mxu0 %v134
  %282 = vmatpush1.xpose.msra.mxu0 %v54
  %283 = vmatprep.subr.mxu0 %v131
  %284 = vmatpush1.xpose.msra.mxu0 %v50
  %285 = vmatprep.subr.mxu0 %v128
  %286 = vmatpush1.xpose.msra.mxu0 %v46
  %287 = vmatprep.subr.mxu0 %v125
  %288 = vmatpush1.xpose.msra.mxu0 %v42
  %289 = vmatprep.subr.mxu0 0.0
  %290 = vmatpush2.xpose.msra.mxu0 0.0
  %291 = vmatprep.subr.mxu0 0.0
  %292 = vmatpush2.xpose.msra.mxu0 0.0
  %293 = vmatprep.subr.mxu0 0.0
  %294 = vmatpush2.xpose.msra.mxu0 0.0
  %295 = vmatprep.subr.mxu0 0.0
  %296 = vmatpush2.xpose.msra.mxu0 0.0
  %297 = vmatprep.subr.mxu0 0.0
  %298 = vmatpush2.xpose.msra.mxu0 0.0
  %299 = vmatprep.subr.mxu0 0.0
  %300 = vmatpush2.xpose.msra.mxu0 0.0
  %301 = vmatprep.subr.mxu0 0.0
  %302 = vmatpush2.xpose.msra.mxu0 0.0
  %303 = vmatprep.subr.mxu0 0.0
  %304 = vmatpush2.xpose.msra.mxu0 0.0
  %305 = vmatprep.subr.mxu0 0.0
  %306 = vmatpush2.xpose.msra.mxu0 0.0
  %307 = vmatprep.subr.mxu0 0.0
  %308 = vmatpush2.xpose.msra.mxu0 0.0
  %309 = vmatprep.subr.mxu0 0.0
  %310 = vmatpush2.xpose.msra.mxu0 0.0
  %311 = vmatprep.subr.mxu0 0.0
  %312 = vmatpush2.xpose.msra.mxu0 0.0
  %313 = vmatprep.subr.mxu0 0.0
  %314 = vmatpush2.xpose.msra.mxu0 0.0
  %315 = vmatprep.subr.mxu0 0.0
  %316 = vmatpush2.xpose.msra.mxu0 0.0
  %317 = vmatprep.subr.mxu0 0.0
  %318 = vmatpush2.xpose.msra.mxu0 0.0
  %319 = vmatprep.subr.mxu0 0.0
  %320 = vmatpush2.xpose.msra.mxu0 0.0
  %321 = vmatprep.mubr.f32.mxu0 %v113
  %322 = vmatmul.mubr.f32.gmra.mxu0 %v26
  %v323 = vpop.f32.mrf.mxu0
  %v324 = vadd.f32 %v239, %v323
  %v325 = vpop.f32.mrf.mxu0
  %326 = vmatprep.mubr.f32.mxu0 %v116
  %327 = vmatmul.mubr.f32.gmra.mxu0 %v30
  %v328 = vpop.f32.mrf.mxu0
  %v329 = vadd.f32 %v244, %v328
  %v330 = vpop.f32.mrf.mxu0
  %331 = vmatprep.mubr.f32.mxu0 %v119
  %332 = vmatmul.mubr.f32.gmra.mxu0 %v34
  %v333 = vpop.f32.mrf.mxu0
  %v334 = vadd.f32 %v249, %v333
  %v335 = vpop.f32.mrf.mxu0
  %336 = vmatprep.mubr.f32.mxu0 %v122
  %337 = vmatmul.mubr.f32.gmra.mxu0 %v38
  %v338 = vpop.f32.mrf.mxu0
  %v339 = vadd.f32 %v254, %v338
  %v340 = vpop.f32.mrf.mxu0
  %341 = vdwg.mxu0
  %v346 = vcombine.high %v324, %v324
  %v348 = vunpack.c.l.s4 1983009808
  %v349 = vunpack.c.0.s8 %v348
  %v350 = vlaneseq
  %v351 = vshrl.u32 %v350, 7
  %v352 = vsub.s32 %v349, %v351
  %v353 = vrot.slane %v324, %v352
  %v355 = vunpack.c.l.s4 1983009808
  %v356 = vunpack.c.0.s8 %v355
  %v357 = vlaneseq
  %v358 = vshrl.u32 %v357, 7
  %v359 = vsub.s32 %v356, %v358
  %v360 = vrot.slane %v346, %v359
  %v361 = vcombine.high %v353, %v353
  %v362 = vcombine.high %v360, %v360
  %v363 = vcombine.high %v329, %v329
  %v365 = vunpack.c.l.s4 1983009808
  %v366 = vunpack.c.0.s8 %v365
  %v367 = vlaneseq
  %v368 = vshrl.u32 %v367, 7
  %v369 = vsub.s32 %v366, %v368
  %v370 = vrot.slane %v329, %v369
  %v372 = vunpack.c.l.s4 1983009808
  %v373 = vunpack.c.0.s8 %v372
  %v374 = vlaneseq
  %v375 = vshrl.u32 %v374, 7
  %v376 = vsub.s32 %v373, %v375
  %v377 = vrot.slane %v363, %v376
  %v378 = vcombine.high %v370, %v370
  %v379 = vcombine.high %v377, %v377
  %v380 = vcombine.high %v334, %v334
  %v382 = vunpack.c.l.s4 1983009808
  %v383 = vunpack.c.0.s8 %v382
  %v384 = vlaneseq
  %v385 = vshrl.u32 %v384, 7
  %v386 = vsub.s32 %v383, %v385
  %v387 = vrot.slane %v334, %v386
  %v389 = vunpack.c.l.s4 1983009808
  %v390 = vunpack.c.0.s8 %v389
  %v391 = vlaneseq
  %v392 = vshrl.u32 %v391, 7
  %v393 = vsub.s32 %v390, %v392
  %v394 = vrot.slane %v380, %v393
  %v395 = vcombine.high %v387, %v387
  %v396 = vcombine.high %v394, %v394
  %v397 = vcombine.high %v339, %v339
  %v399 = vunpack.c.l.s4 1983009808
  %v400 = vunpack.c.0.s8 %v399
  %v401 = vlaneseq
  %v402 = vshrl.u32 %v401, 7
  %v403 = vsub.s32 %v400, %v402
  %v404 = vrot.slane %v339, %v403
  %v406 = vunpack.c.l.s4 1983009808
  %v407 = vunpack.c.0.s8 %v406
  %v408 = vlaneseq
  %v409 = vshrl.u32 %v408, 7
  %v410 = vsub.s32 %v407, %v409
  %v411 = vrot.slane %v397, %v410
  %v412 = vcombine.high %v404, %v404
  %v413 = vcombine.high %v411, %v411
  %v430 = vld [vmem:[%s2] sm:$0xff]
  %v431 = vld [vmem:[%s2 + $0x8] sm:$0xff]
  %v432 = vld [vmem:[%s2 + $0x10] sm:$0xff]
  %v433 = vld [vmem:[%s2 + $0x18] sm:$0xff]
  %v434 = vld [vmem:[%s2 + $0x20] sm:$0xff]
  %v435 = vld [vmem:[%s2 + $0x28] sm:$0xff]
  %v436 = vld [vmem:[%s2 + $0x30] sm:$0xff]
  %v437 = vld [vmem:[%s2 + $0x38] sm:$0xff]
  %v438 = vld [vmem:[%s2 + $0x40] sm:$0xff]
  %v439 = vld [vmem:[%s2 + $0x48] sm:$0xff]
  %v440 = vld [vmem:[%s2 + $0x50] sm:$0xff]
  %v441 = vld [vmem:[%s2 + $0x58] sm:$0xff]
  %v442 = vld [vmem:[%s2 + $0x60] sm:$0xff]
  %v443 = vld [vmem:[%s2 + $0x68] sm:$0xff]
  %v444 = vld [vmem:[%s2 + $0x70] sm:$0xff]
  %v445 = vld [vmem:[%s2 + $0x78] sm:$0xff]
  %vm446 = vcmask 261120
  %v448 = vsel %vm446, 0.0, 0
  %v451 = vsel %vm446, %v430, 0
  %v454 = vsel %vm446, %v431, 0
  %v457 = vsel %vm446, %v432, 0
  %v460 = vsel %vm446, %v433, 0
  %v463 = vsel %vm446, %v434, 0
  %v466 = vsel %vm446, %v435, 0
  %v469 = vsel %vm446, %v436, 0
  %v472 = vsel %vm446, %v437, 0
  %v475 = vsel %vm446, %v438, 0
  %v478 = vsel %vm446, %v439, 0
  %v481 = vsel %vm446, %v440, 0
  %v484 = vsel %vm446, %v441, 0
  %v487 = vsel %vm446, %v442, 0
  %v490 = vsel %vm446, %v443, 0
  %v493 = vsel %vm446, %v444, 0
  %v496 = vsel %vm446, %v445, 0
  %498 = vmatprep.subr.mxu0 0.0
  %499 = vmatpush1.xpose.msra.mxu0 %v496
  %500 = vmatprep.subr.mxu0 0.0
  %501 = vmatpush1.xpose.msra.mxu0 %v493
  %502 = vmatprep.subr.mxu0 0.0
  %503 = vmatpush1.xpose.msra.mxu0 %v490
  %504 = vmatprep.subr.mxu0 0.0
  %505 = vmatpush1.xpose.msra.mxu0 %v487
  %506 = vmatprep.subr.mxu0 0.0
  %507 = vmatpush1.xpose.msra.mxu0 %v484
  %508 = vmatprep.subr.mxu0 0.0
  %509 = vmatpush1.xpose.msra.mxu0 %v481
  %510 = vmatprep.subr.mxu0 0.0
  %511 = vmatpush1.xpose.msra.mxu0 %v478
  %512 = vmatprep.subr.mxu0 0.0
  %513 = vmatpush1.xpose.msra.mxu0 %v475
  %514 = vmatprep.subr.mxu0 0.0
  %515 = vmatpush1.xpose.msra.mxu0 %v472
  %516 = vmatprep.subr.mxu0 0.0
  %517 = vmatpush1.xpose.msra.mxu0 %v469
  %518 = vmatprep.subr.mxu0 0.0
  %519 = vmatpush1.xpose.msra.mxu0 %v466
  %520 = vmatprep.subr.mxu0 0.0
  %521 = vmatpush1.xpose.msra.mxu0 %v463
  %522 = vmatprep.subr.mxu0 0.0
  %523 = vmatpush1.xpose.msra.mxu0 %v460
  %524 = vmatprep.subr.mxu0 0.0
  %525 = vmatpush1.xpose.msra.mxu0 %v457
  %526 = vmatprep.subr.mxu0 0.0
  %527 = vmatpush1.xpose.msra.mxu0 %v454
  %528 = vmatprep.subr.mxu0 0.0
  %529 = vmatpush1.xpose.msra.mxu0 %v451
  %530 = vmatprep.subr.mxu0 0.0
  %531 = vmatpush2.xpose.msra.mxu0 0.0
  %532 = vmatprep.subr.mxu0 0.0
  %533 = vmatpush2.xpose.msra.mxu0 0.0
  %534 = vmatprep.subr.mxu0 0.0
  %535 = vmatpush2.xpose.msra.mxu0 0.0
  %536 = vmatprep.subr.mxu0 0.0
  %537 = vmatpush2.xpose.msra.mxu0 0.0
  %538 = vmatprep.subr.mxu0 0.0
  %539 = vmatpush2.xpose.msra.mxu0 0.0
  %540 = vmatprep.subr.mxu0 0.0
  %541 = vmatpush2.xpose.msra.mxu0 0.0
  %542 = vmatprep.subr.mxu0 0.0
  %543 = vmatpush2.xpose.msra.mxu0 0.0
  %544 = vmatprep.subr.mxu0 0.0
  %545 = vmatpush2.xpose.msra.mxu0 0.0
  %546 = vmatprep.subr.mxu0 0.0
  %547 = vmatpush2.xpose.msra.mxu0 0.0
  %548 = vmatprep.subr.mxu0 0.0
  %549 = vmatpush2.xpose.msra.mxu0 0.0
  %550 = vmatprep.subr.mxu0 0.0
  %551 = vmatpush2.xpose.msra.mxu0 0.0
  %552 = vmatprep.subr.mxu0 0.0
  %553 = vmatpush2.xpose.msra.mxu0 0.0
  %554 = vmatprep.subr.mxu0 0.0
  %555 = vmatpush2.xpose.msra.mxu0 0.0
  %556 = vmatprep.subr.mxu0 0.0
  %557 = vmatpush2.xpose.msra.mxu0 0.0
  %558 = vmatprep.subr.mxu0 0.0
  %559 = vmatpush2.xpose.msra.mxu0 0.0
  %560 = vmatprep.subr.mxu0 0.0
  %561 = vmatpush2.xpose.msra.mxu0 0.0
  %562 = vmatprep.mubr.f32.mxu0 0.0
  %563 = vmatmul.mubr.f32.gmra.mxu0 %v448
  %v564 = vpop.f32.mrf.mxu0
  %v565 = vadd.f32 0.0, %v564
  %v566 = vpop.f32.mrf.mxu0
  %567 = vdwg.mxu0
  %v568 = vadd.f32 %v353, %v565
  %v569 = vxor.u32 %v568, 2147483648
  %v570 = vmul.f32 %v569, 1.442695
  %v571 = vpow.pop %v570
  %v572 = vadd.f32 %v571, 1.0
  %v573 = vrcp.pop %v572
  %v574 = vmul.f32 1.0, %v573
  %v575 = vtanh.pop %v568
  %v576 = vmul.f32 %v574, 0.0
  %578 = vrot.lane.b32.xlu0 %v575, 64
  %v579 = vpop.permute.xlu0 %578
  %v581 = vmul.f32 %v574, %v579
  %583 = vrot.lane.b32.xlu0 %v581, 32
  %v584 = vpop.permute.xlu0 %583
  %v586 = vadd.f32 %v576, %v584
  %v587 = vtanh.pop %v586
  %589 = vrot.lane.b32.xlu0 %v587, 64
  %v590 = vpop.permute.xlu0 %589
  %v592 = vmul.f32 %v574, %v590
  %v595 = vunpack.c.l.s4 1983009808
  %v596 = vunpack.c.0.s8 %v595
  %v597 = vlaneseq
  %v598 = vshrl.u32 %v597, 7
  %v599 = vsub.s32 %v596, %v598
  %v600 = vrot.slane %v592, %v599
  %601 = vrot.lane.b32.xlu0 %v600, 32
  %v602 = vpop.permute.xlu0 %601
  %v603 = vsel %vm446, %v602, 0
  %605 = vmatprep.subr.mxu0 0.0
  %606 = vmatpush1.xpose.msra.mxu0 %v496
  %607 = vmatprep.subr.mxu0 0.0
  %608 = vmatpush1.xpose.msra.mxu0 %v493
  %609 = vmatprep.subr.mxu0 0.0
  %610 = vmatpush1.xpose.msra.mxu0 %v490
  %611 = vmatprep.subr.mxu0 0.0
  %612 = vmatpush1.xpose.msra.mxu0 %v487
  %613 = vmatprep.subr.mxu0 0.0
  %614 = vmatpush1.xpose.msra.mxu0 %v484
  %615 = vmatprep.subr.mxu0 0.0
  %616 = vmatpush1.xpose.msra.mxu0 %v481
  %617 = vmatprep.subr.mxu0 0.0
  %618 = vmatpush1.xpose.msra.mxu0 %v478
  %619 = vmatprep.subr.mxu0 0.0
  %620 = vmatpush1.xpose.msra.mxu0 %v475
  %621 = vmatprep.subr.mxu0 0.0
  %622 = vmatpush1.xpose.msra.mxu0 %v472
  %623 = vmatprep.subr.mxu0 0.0
  %624 = vmatpush1.xpose.msra.mxu0 %v469
  %625 = vmatprep.subr.mxu0 0.0
  %626 = vmatpush1.xpose.msra.mxu0 %v466
  %627 = vmatprep.subr.mxu0 0.0
  %628 = vmatpush1.xpose.msra.mxu0 %v463
  %629 = vmatprep.subr.mxu0 0.0
  %630 = vmatpush1.xpose.msra.mxu0 %v460
  %631 = vmatprep.subr.mxu0 0.0
  %632 = vmatpush1.xpose.msra.mxu0 %v457
  %633 = vmatprep.subr.mxu0 0.0
  %634 = vmatpush1.xpose.msra.mxu0 %v454
  %635 = vmatprep.subr.mxu0 0.0
  %636 = vmatpush1.xpose.msra.mxu0 %v451
  %637 = vmatprep.subr.mxu0 0.0
  %638 = vmatpush2.xpose.msra.mxu0 0.0
  %639 = vmatprep.subr.mxu0 0.0
  %640 = vmatpush2.xpose.msra.mxu0 0.0
  %641 = vmatprep.subr.mxu0 0.0
  %642 = vmatpush2.xpose.msra.mxu0 0.0
  %643 = vmatprep.subr.mxu0 0.0
  %644 = vmatpush2.xpose.msra.mxu0 0.0
  %645 = vmatprep.subr.mxu0 0.0
  %646 = vmatpush2.xpose.msra.mxu0 0.0
  %647 = vmatprep.subr.mxu0 0.0
  %648 = vmatpush2.xpose.msra.mxu0 0.0
  %649 = vmatprep.subr.mxu0 0.0
  %650 = vmatpush2.xpose.msra.mxu0 0.0
  %651 = vmatprep.subr.mxu0 0.0
  %652 = vmatpush2.xpose.msra.mxu0 0.0
  %653 = vmatprep.subr.mxu0 0.0
  %654 = vmatpush2.xpose.msra.mxu0 0.0
  %655 = vmatprep.subr.mxu0 0.0
  %656 = vmatpush2.xpose.msra.mxu0 0.0
  %657 = vmatprep.subr.mxu0 0.0
  %658 = vmatpush2.xpose.msra.mxu0 0.0
  %659 = vmatprep.subr.mxu0 0.0
  %660 = vmatpush2.xpose.msra.mxu0 0.0
  %661 = vmatprep.subr.mxu0 0.0
  %662 = vmatpush2.xpose.msra.mxu0 0.0
  %663 = vmatprep.subr.mxu0 0.0
  %664 = vmatpush2.xpose.msra.mxu0 0.0
  %665 = vmatprep.subr.mxu0 0.0
  %666 = vmatpush2.xpose.msra.mxu0 0.0
  %667 = vmatprep.subr.mxu0 0.0
  %668 = vmatpush2.xpose.msra.mxu0 0.0
  %669 = vmatprep.mubr.f32.mxu0 0.0
  %670 = vmatmul.mubr.f32.gmra.mxu0 %v603
  %v671 = vpop.f32.mrf.mxu0
  %v672 = vadd.f32 0.0, %v671
  %v673 = vpop.f32.mrf.mxu0
  %674 = vdwg.mxu0
  %v675 = vadd.f32 %v361, %v672
  %v676 = vxor.u32 %v675, 2147483648
  %v677 = vmul.f32 %v676, 1.442695
  %v678 = vpow.pop %v677
  %v679 = vadd.f32 %v678, 1.0
  %v680 = vrcp.pop %v679
  %v681 = vmul.f32 1.0, %v680
  %v682 = vtanh.pop %v675
  %v683 = vmul.f32 %v681, %v586
  %685 = vrot.lane.b32.xlu0 %v682, 64
  %v686 = vpop.permute.xlu0 %685
  %v688 = vmul.f32 %v681, %v686
  %690 = vrot.lane.b32.xlu0 %v688, 32
  %v691 = vpop.permute.xlu0 %690
  %v693 = vadd.f32 %v683, %v691
  %v694 = vtanh.pop %v693
  %696 = vrot.lane.b32.xlu0 %v694, 64
  %v697 = vpop.permute.xlu0 %696
  %v699 = vmul.f32 %v681, %v697
  %v702 = vunpack.c.l.s4 1983009808
  %v703 = vunpack.c.0.s8 %v702
  %v704 = vlaneseq
  %v705 = vshrl.u32 %v704, 7
  %v706 = vsub.s32 %v703, %v705
  %v707 = vrot.slane %v699, %v706
  %708 = vrot.lane.b32.xlu0 %v707, 32
  %v709 = vpop.permute.xlu0 %708
  %v710 = vsel %vm446, %v709, 0
  %712 = vmatprep.subr.mxu0 0.0
  %713 = vmatpush1.xpose.msra.mxu0 %v496
  %714 = vmatprep.subr.mxu0 0.0
  %715 = vmatpush1.xpose.msra.mxu0 %v493
  %716 = vmatprep.subr.mxu0 0.0
  %717 = vmatpush1.xpose.msra.mxu0 %v490
  %718 = vmatprep.subr.mxu0 0.0
  %719 = vmatpush1.xpose.msra.mxu0 %v487
  %720 = vmatprep.subr.mxu0 0.0
  %721 = vmatpush1.xpose.msra.mxu0 %v484
  %722 = vmatprep.subr.mxu0 0.0
  %723 = vmatpush1.xpose.msra.mxu0 %v481
  %724 = vmatprep.subr.mxu0 0.0
  %725 = vmatpush1.xpose.msra.mxu0 %v478
  %726 = vmatprep.subr.mxu0 0.0
  %727 = vmatpush1.xpose.msra.mxu0 %v475
  %728 = vmatprep.subr.mxu0 0.0
  %729 = vmatpush1.xpose.msra.mxu0 %v472
  %730 = vmatprep.subr.mxu0 0.0
  %731 = vmatpush1.xpose.msra.mxu0 %v469
  %732 = vmatprep.subr.mxu0 0.0
  %733 = vmatpush1.xpose.msra.mxu0 %v466
  %734 = vmatprep.subr.mxu0 0.0
  %735 = vmatpush1.xpose.msra.mxu0 %v463
  %736 = vmatprep.subr.mxu0 0.0
  %737 = vmatpush1.xpose.msra.mxu0 %v460
  %738 = vmatprep.subr.mxu0 0.0
  %739 = vmatpush1.xpose.msra.mxu0 %v457
  %740 = vmatprep.subr.mxu0 0.0
  %741 = vmatpush1.xpose.msra.mxu0 %v454
  %742 = vmatprep.subr.mxu0 0.0
  %743 = vmatpush1.xpose.msra.mxu0 %v451
  %744 = vmatprep.subr.mxu0 0.0
  %745 = vmatpush2.xpose.msra.mxu0 0.0
  %746 = vmatprep.subr.mxu0 0.0
  %747 = vmatpush2.xpose.msra.mxu0 0.0
  %748 = vmatprep.subr.mxu0 0.0
  %749 = vmatpush2.xpose.msra.mxu0 0.0
  %750 = vmatprep.subr.mxu0 0.0
  %751 = vmatpush2.xpose.msra.mxu0 0.0
  %752 = vmatprep.subr.mxu0 0.0
  %753 = vmatpush2.xpose.msra.mxu0 0.0
  %754 = vmatprep.subr.mxu0 0.0
  %755 = vmatpush2.xpose.msra.mxu0 0.0
  %756 = vmatprep.subr.mxu0 0.0
  %757 = vmatpush2.xpose.msra.mxu0 0.0
  %758 = vmatprep.subr.mxu0 0.0
  %759 = vmatpush2.xpose.msra.mxu0 0.0
  %760 = vmatprep.subr.mxu0 0.0
  %761 = vmatpush2.xpose.msra.mxu0 0.0
  %762 = vmatprep.subr.mxu0 0.0
  %763 = vmatpush2.xpose.msra.mxu0 0.0
  %764 = vmatprep.subr.mxu0 0.0
  %765 = vmatpush2.xpose.msra.mxu0 0.0
  %766 = vmatprep.subr.mxu0 0.0
  %767 = vmatpush2.xpose.msra.mxu0 0.0
  %768 = vmatprep.subr.mxu0 0.0
  %769 = vmatpush2.xpose.msra.mxu0 0.0
  %770 = vmatprep.subr.mxu0 0.0
  %771 = vmatpush2.xpose.msra.mxu0 0.0
  %772 = vmatprep.subr.mxu0 0.0
  %773 = vmatpush2.xpose.msra.mxu0 0.0
  %774 = vmatprep.subr.mxu0 0.0
  %775 = vmatpush2.xpose.msra.mxu0 0.0
  %776 = vmatprep.mubr.f32.mxu0 0.0
  %777 = vmatmul.mubr.f32.gmra.mxu0 %v710
  %v778 = vpop.f32.mrf.mxu0
  %v779 = vadd.f32 0.0, %v778
  %v780 = vpop.f32.mrf.mxu0
  %781 = vdwg.mxu0
  %v782 = vadd.f32 %v360, %v779
  %v783 = vxor.u32 %v782, 2147483648
  %v784 = vmul.f32 %v783, 1.442695
  %v785 = vpow.pop %v784
  %v786 = vadd.f32 %v785, 1.0
  %v787 = vrcp.pop %v786
  %v788 = vmul.f32 1.0, %v787
  %v789 = vtanh.pop %v782
  %v790 = vmul.f32 %v788, %v693
  %792 = vrot.lane.b32.xlu0 %v789, 64
  %v793 = vpop.permute.xlu0 %792
  %v795 = vmul.f32 %v788, %v793
  %797 = vrot.lane.b32.xlu0 %v795, 32
  %v798 = vpop.permute.xlu0 %797
  %v800 = vadd.f32 %v790, %v798
  %v801 = vtanh.pop %v800
  %803 = vrot.lane.b32.xlu0 %v801, 64
  %v804 = vpop.permute.xlu0 %803
  %v806 = vmul.f32 %v788, %v804
  %v809 = vunpack.c.l.s4 1983009808
  %v810 = vunpack.c.0.s8 %v809
  %v811 = vlaneseq
  %v812 = vshrl.u32 %v811, 7
  %v813 = vsub.s32 %v810, %v812
  %v814 = vrot.slane %v806, %v813
  %815 = vrot.lane.b32.xlu0 %v814, 32
  %v816 = vpop.permute.xlu0 %815
  %v817 = vsel %vm446, %v816, 0
  %819 = vmatprep.subr.mxu0 0.0
  %820 = vmatpush1.xpose.msra.mxu0 %v496
  %821 = vmatprep.subr.mxu0 0.0
  %822 = vmatpush1.xpose.msra.mxu0 %v493
  %823 = vmatprep.subr.mxu0 0.0
  %824 = vmatpush1.xpose.msra.mxu0 %v490
  %825 = vmatprep.subr.mxu0 0.0
  %826 = vmatpush1.xpose.msra.mxu0 %v487
  %827 = vmatprep.subr.mxu0 0.0
  %828 = vmatpush1.xpose.msra.mxu0 %v484
  %829 = vmatprep.subr.mxu0 0.0
  %830 = vmatpush1.xpose.msra.mxu0 %v481
  %831 = vmatprep.subr.mxu0 0.0
  %832 = vmatpush1.xpose.msra.mxu0 %v478
  %833 = vmatprep.subr.mxu0 0.0
  %834 = vmatpush1.xpose.msra.mxu0 %v475
  %835 = vmatprep.subr.mxu0 0.0
  %836 = vmatpush1.xpose.msra.mxu0 %v472
  %837 = vmatprep.subr.mxu0 0.0
  %838 = vmatpush1.xpose.msra.mxu0 %v469
  %839 = vmatprep.subr.mxu0 0.0
  %840 = vmatpush1.xpose.msra.mxu0 %v466
  %841 = vmatprep.subr.mxu0 0.0
  %842 = vmatpush1.xpose.msra.mxu0 %v463
  %843 = vmatprep.subr.mxu0 0.0
  %844 = vmatpush1.xpose.msra.mxu0 %v460
  %845 = vmatprep.subr.mxu0 0.0
  %846 = vmatpush1.xpose.msra.mxu0 %v457
  %847 = vmatprep.subr.mxu0 0.0
  %848 = vmatpush1.xpose.msra.mxu0 %v454
  %849 = vmatprep.subr.mxu0 0.0
  %850 = vmatpush1.xpose.msra.mxu0 %v451
  %851 = vmatprep.subr.mxu0 0.0
  %852 = vmatpush2.xpose.msra.mxu0 0.0
  %853 = vmatprep.subr.mxu0 0.0
  %854 = vmatpush2.xpose.msra.mxu0 0.0
  %855 = vmatprep.subr.mxu0 0.0
  %856 = vmatpush2.xpose.msra.mxu0 0.0
  %857 = vmatprep.subr.mxu0 0.0
  %858 = vmatpush2.xpose.msra.mxu0 0.0
  %859 = vmatprep.subr.mxu0 0.0
  %860 = vmatpush2.xpose.msra.mxu0 0.0
  %861 = vmatprep.subr.mxu0 0.0
  %862 = vmatpush2.xpose.msra.mxu0 0.0
  %863 = vmatprep.subr.mxu0 0.0
  %864 = vmatpush2.xpose.msra.mxu0 0.0
  %865 = vmatprep.subr.mxu0 0.0
  %866 = vmatpush2.xpose.msra.mxu0 0.0
  %867 = vmatprep.subr.mxu0 0.0
  %868 = vmatpush2.xpose.msra.mxu0 0.0
  %869 = vmatprep.subr.mxu0 0.0
  %870 = vmatpush2.xpose.msra.mxu0 0.0
  %871 = vmatprep.subr.mxu0 0.0
  %872 = vmatpush2.xpose.msra.mxu0 0.0
  %873 = vmatprep.subr.mxu0 0.0
  %874 = vmatpush2.xpose.msra.mxu0 0.0
  %875 = vmatprep.subr.mxu0 0.0
  %876 = vmatpush2.xpose.msra.mxu0 0.0
  %877 = vmatprep.subr.mxu0 0.0
  %878 = vmatpush2.xpose.msra.mxu0 0.0
  %879 = vmatprep.subr.mxu0 0.0
  %880 = vmatpush2.xpose.msra.mxu0 0.0
  %881 = vmatprep.subr.mxu0 0.0
  %882 = vmatpush2.xpose.msra.mxu0 0.0
  %883 = vmatprep.mubr.f32.mxu0 0.0
  %884 = vmatmul.mubr.f32.gmra.mxu0 %v817
  %v885 = vpop.f32.mrf.mxu0
  %v886 = vadd.f32 0.0, %v885
  %v887 = vpop.f32.mrf.mxu0
  %888 = vdwg.mxu0
  %v889 = vadd.f32 %v362, %v886
  %v890 = vxor.u32 %v889, 2147483648
  %v891 = vmul.f32 %v890, 1.442695
  %v892 = vpow.pop %v891
  %v893 = vadd.f32 %v892, 1.0
  %v894 = vrcp.pop %v893
  %v895 = vmul.f32 1.0, %v894
  %v896 = vtanh.pop %v889
  %v897 = vmul.f32 %v895, %v800
  %899 = vrot.lane.b32.xlu0 %v896, 64
  %v900 = vpop.permute.xlu0 %899
  %v902 = vmul.f32 %v895, %v900
  %904 = vrot.lane.b32.xlu0 %v902, 32
  %v905 = vpop.permute.xlu0 %904
  %v907 = vadd.f32 %v897, %v905
  %v908 = vtanh.pop %v907
  %910 = vrot.lane.b32.xlu0 %v908, 64
  %v911 = vpop.permute.xlu0 %910
  %v913 = vmul.f32 %v895, %v911
  %v916 = vunpack.c.l.s4 1983009808
  %v917 = vunpack.c.0.s8 %v916
  %v918 = vlaneseq
  %v919 = vshrl.u32 %v918, 7
  %v920 = vsub.s32 %v917, %v919
  %v921 = vrot.slane %v913, %v920
  %922 = vrot.lane.b32.xlu0 %v921, 32
  %v923 = vpop.permute.xlu0 %922
  %v924 = vsel %vm446, %v923, 0
  %926 = vmatprep.subr.mxu0 0.0
  %927 = vmatpush1.xpose.msra.mxu0 %v496
  %928 = vmatprep.subr.mxu0 0.0
  %929 = vmatpush1.xpose.msra.mxu0 %v493
  %930 = vmatprep.subr.mxu0 0.0
  %931 = vmatpush1.xpose.msra.mxu0 %v490
  %932 = vmatprep.subr.mxu0 0.0
  %933 = vmatpush1.xpose.msra.mxu0 %v487
  %934 = vmatprep.subr.mxu0 0.0
  %935 = vmatpush1.xpose.msra.mxu0 %v484
  %936 = vmatprep.subr.mxu0 0.0
  %937 = vmatpush1.xpose.msra.mxu0 %v481
  %938 = vmatprep.subr.mxu0 0.0
  %939 = vmatpush1.xpose.msra.mxu0 %v478
  %940 = vmatprep.subr.mxu0 0.0
  %941 = vmatpush1.xpose.msra.mxu0 %v475
  %942 = vmatprep.subr.mxu0 0.0
  %943 = vmatpush1.xpose.msra.mxu0 %v472
  %944 = vmatprep.subr.mxu0 0.0
  %945 = vmatpush1.xpose.msra.mxu0 %v469
  %946 = vmatprep.subr.mxu0 0.0
  %947 = vmatpush1.xpose.msra.mxu0 %v466
  %948 = vmatprep.subr.mxu0 0.0
  %949 = vmatpush1.xpose.msra.mxu0 %v463
  %950 = vmatprep.subr.mxu0 0.0
  %951 = vmatpush1.xpose.msra.mxu0 %v460
  %952 = vmatprep.subr.mxu0 0.0
  %953 = vmatpush1.xpose.msra.mxu0 %v457
  %954 = vmatprep.subr.mxu0 0.0
  %955 = vmatpush1.xpose.msra.mxu0 %v454
  %956 = vmatprep.subr.mxu0 0.0
  %957 = vmatpush1.xpose.msra.mxu0 %v451
  %958 = vmatprep.subr.mxu0 0.0
  %959 = vmatpush2.xpose.msra.mxu0 0.0
  %960 = vmatprep.subr.mxu0 0.0
  %961 = vmatpush2.xpose.msra.mxu0 0.0
  %962 = vmatprep.subr.mxu0 0.0
  %963 = vmatpush2.xpose.msra.mxu0 0.0
  %964 = vmatprep.subr.mxu0 0.0
  %965 = vmatpush2.xpose.msra.mxu0 0.0
  %966 = vmatprep.subr.mxu0 0.0
  %967 = vmatpush2.xpose.msra.mxu0 0.0
  %968 = vmatprep.subr.mxu0 0.0
  %969 = vmatpush2.xpose.msra.mxu0 0.0
  %970 = vmatprep.subr.mxu0 0.0
  %971 = vmatpush2.xpose.msra.mxu0 0.0
  %972 = vmatprep.subr.mxu0 0.0
  %973 = vmatpush2.xpose.msra.mxu0 0.0
  %974 = vmatprep.subr.mxu0 0.0
  %975 = vmatpush2.xpose.msra.mxu0 0.0
  %976 = vmatprep.subr.mxu0 0.0
  %977 = vmatpush2.xpose.msra.mxu0 0.0
  %978 = vmatprep.subr.mxu0 0.0
  %979 = vmatpush2.xpose.msra.mxu0 0.0
  %980 = vmatprep.subr.mxu0 0.0
  %981 = vmatpush2.xpose.msra.mxu0 0.0
  %982 = vmatprep.subr.mxu0 0.0
  %983 = vmatpush2.xpose.msra.mxu0 0.0
  %984 = vmatprep.subr.mxu0 0.0
  %985 = vmatpush2.xpose.msra.mxu0 0.0
  %986 = vmatprep.subr.mxu0 0.0
  %987 = vmatpush2.xpose.msra.mxu0 0.0
  %988 = vmatprep.subr.mxu0 0.0
  %989 = vmatpush2.xpose.msra.mxu0 0.0
  %990 = vmatprep.mubr.f32.mxu0 0.0
  %991 = vmatmul.mubr.f32.gmra.mxu0 %v924
  %v992 = vpop.f32.mrf.mxu0
  %v993 = vadd.f32 0.0, %v992
  %v994 = vpop.f32.mrf.mxu0
  %995 = vdwg.mxu0
  %v996 = vadd.f32 %v370, %v993
  %v997 = vxor.u32 %v996, 2147483648
  %v998 = vmul.f32 %v997, 1.442695
  %v999 = vpow.pop %v998
  %v1000 = vadd.f32 %v999, 1.0
  %v1001 = vrcp.pop %v1000
  %v1002 = vmul.f32 1.0, %v1001
  %v1003 = vtanh.pop %v996
  %v1004 = vmul.f32 %v1002, %v907
  %1006 = vrot.lane.b32.xlu0 %v1003, 64
  %v1007 = vpop.permute.xlu0 %1006
  %v1009 = vmul.f32 %v1002, %v1007
  %1011 = vrot.lane.b32.xlu0 %v1009, 32
  %v1012 = vpop.permute.xlu0 %1011
  %v1014 = vadd.f32 %v1004, %v1012
  %v1015 = vtanh.pop %v1014
  %1017 = vrot.lane.b32.xlu0 %v1015, 64
  %v1018 = vpop.permute.xlu0 %1017
  %v1020 = vmul.f32 %v1002, %v1018
  %v1023 = vunpack.c.l.s4 1983009808
  %v1024 = vunpack.c.0.s8 %v1023
  %v1025 = vlaneseq
  %v1026 = vshrl.u32 %v1025, 7
  %v1027 = vsub.s32 %v1024, %v1026
  %v1028 = vrot.slane %v1020, %v1027
  %1029 = vrot.lane.b32.xlu0 %v1028, 32
  %v1030 = vpop.permute.xlu0 %1029
  %v1031 = vsel %vm446, %v1030, 0
  %1033 = vmatprep.subr.mxu0 0.0
  %1034 = vmatpush1.xpose.msra.mxu0 %v496
  %1035 = vmatprep.subr.mxu0 0.0
  %1036 = vmatpush1.xpose.msra.mxu0 %v493
  %1037 = vmatprep.subr.mxu0 0.0
  %1038 = vmatpush1.xpose.msra.mxu0 %v490
  %1039 = vmatprep.subr.mxu0 0.0
  %1040 = vmatpush1.xpose.msra.mxu0 %v487
  %1041 = vmatprep.subr.mxu0 0.0
  %1042 = vmatpush1.xpose.msra.mxu0 %v484
  %1043 = vmatprep.subr.mxu0 0.0
  %1044 = vmatpush1.xpose.msra.mxu0 %v481
  %1045 = vmatprep.subr.mxu0 0.0
  %1046 = vmatpush1.xpose.msra.mxu0 %v478
  %1047 = vmatprep.subr.mxu0 0.0
  %1048 = vmatpush1.xpose.msra.mxu0 %v475
  %1049 = vmatprep.subr.mxu0 0.0
  %1050 = vmatpush1.xpose.msra.mxu0 %v472
  %1051 = vmatprep.subr.mxu0 0.0
  %1052 = vmatpush1.xpose.msra.mxu0 %v469
  %1053 = vmatprep.subr.mxu0 0.0
  %1054 = vmatpush1.xpose.msra.mxu0 %v466
  %1055 = vmatprep.subr.mxu0 0.0
  %1056 = vmatpush1.xpose.msra.mxu0 %v463
  %1057 = vmatprep.subr.mxu0 0.0
  %1058 = vmatpush1.xpose.msra.mxu0 %v460
  %1059 = vmatprep.subr.mxu0 0.0
  %1060 = vmatpush1.xpose.msra.mxu0 %v457
  %1061 = vmatprep.subr.mxu0 0.0
  %1062 = vmatpush1.xpose.msra.mxu0 %v454
  %1063 = vmatprep.subr.mxu0 0.0
  %1064 = vmatpush1.xpose.msra.mxu0 %v451
  %1065 = vmatprep.subr.mxu0 0.0
  %1066 = vmatpush2.xpose.msra.mxu0 0.0
  %1067 = vmatprep.subr.mxu0 0.0
  %1068 = vmatpush2.xpose.msra.mxu0 0.0
  %1069 = vmatprep.subr.mxu0 0.0
  %1070 = vmatpush2.xpose.msra.mxu0 0.0
  %1071 = vmatprep.subr.mxu0 0.0
  %1072 = vmatpush2.xpose.msra.mxu0 0.0
  %1073 = vmatprep.subr.mxu0 0.0
  %1074 = vmatpush2.xpose.msra.mxu0 0.0
  %1075 = vmatprep.subr.mxu0 0.0
  %1076 = vmatpush2.xpose.msra.mxu0 0.0
  %1077 = vmatprep.subr.mxu0 0.0
  %1078 = vmatpush2.xpose.msra.mxu0 0.0
  %1079 = vmatprep.subr.mxu0 0.0
  %1080 = vmatpush2.xpose.msra.mxu0 0.0
  %1081 = vmatprep.subr.mxu0 0.0
  %1082 = vmatpush2.xpose.msra.mxu0 0.0
  %1083 = vmatprep.subr.mxu0 0.0
  %1084 = vmatpush2.xpose.msra.mxu0 0.0
  %1085 = vmatprep.subr.mxu0 0.0
  %1086 = vmatpush2.xpose.msra.mxu0 0.0
  %1087 = vmatprep.subr.mxu0 0.0
  %1088 = vmatpush2.xpose.msra.mxu0 0.0
  %1089 = vmatprep.subr.mxu0 0.0
  %1090 = vmatpush2.xpose.msra.mxu0 0.0
  %1091 = vmatprep.subr.mxu0 0.0
  %1092 = vmatpush2.xpose.msra.mxu0 0.0
  %1093 = vmatprep.subr.mxu0 0.0
  %1094 = vmatpush2.xpose.msra.mxu0 0.0
  %1095 = vmatprep.subr.mxu0 0.0
  %1096 = vmatpush2.xpose.msra.mxu0 0.0
  %1097 = vmatprep.mubr.f32.mxu0 0.0
  %1098 = vmatmul.mubr.f32.gmra.mxu0 %v1031
  %v1099 = vpop.f32.mrf.mxu0
  %v1100 = vadd.f32 0.0, %v1099
  %v1101 = vpop.f32.mrf.mxu0
  %1102 = vdwg.mxu0
  %v1103 = vadd.f32 %v378, %v1100
  %v1104 = vxor.u32 %v1103, 2147483648
  %v1105 = vmul.f32 %v1104, 1.442695
  %v1106 = vpow.pop %v1105
  %v1107 = vadd.f32 %v1106, 1.0
  %v1108 = vrcp.pop %v1107
  %v1109 = vmul.f32 1.0, %v1108
  %v1110 = vtanh.pop %v1103
  %v1111 = vmul.f32 %v1109, %v1014
  %1113 = vrot.lane.b32.xlu0 %v1110, 64
  %v1114 = vpop.permute.xlu0 %1113
  %v1116 = vmul.f32 %v1109, %v1114
  %1118 = vrot.lane.b32.xlu0 %v1116, 32
  %v1119 = vpop.permute.xlu0 %1118
  %v1121 = vadd.f32 %v1111, %v1119
  %v1122 = vtanh.pop %v1121
  %1124 = vrot.lane.b32.xlu0 %v1122, 64
  %v1125 = vpop.permute.xlu0 %1124
  %v1127 = vmul.f32 %v1109, %v1125
  %v1130 = vunpack.c.l.s4 1983009808
  %v1131 = vunpack.c.0.s8 %v1130
  %v1132 = vlaneseq
  %v1133 = vshrl.u32 %v1132, 7
  %v1134 = vsub.s32 %v1131, %v1133
  %v1135 = vrot.slane %v1127, %v1134
  %1136 = vrot.lane.b32.xlu0 %v1135, 32
  %v1137 = vpop.permute.xlu0 %1136
  %v1138 = vsel %vm446, %v1137, 0
  %1140 = vmatprep.subr.mxu0 0.0
  %1141 = vmatpush1.xpose.msra.mxu0 %v496
  %1142 = vmatprep.subr.mxu0 0.0
  %1143 = vmatpush1.xpose.msra.mxu0 %v493
  %1144 = vmatprep.subr.mxu0 0.0
  %1145 = vmatpush1.xpose.msra.mxu0 %v490
  %1146 = vmatprep.subr.mxu0 0.0
  %1147 = vmatpush1.xpose.msra.mxu0 %v487
  %1148 = vmatprep.subr.mxu0 0.0
  %1149 = vmatpush1.xpose.msra.mxu0 %v484
  %1150 = vmatprep.subr.mxu0 0.0
  %1151 = vmatpush1.xpose.msra.mxu0 %v481
  %1152 = vmatprep.subr.mxu0 0.0
  %1153 = vmatpush1.xpose.msra.mxu0 %v478
  %1154 = vmatprep.subr.mxu0 0.0
  %1155 = vmatpush1.xpose.msra.mxu0 %v475
  %1156 = vmatprep.subr.mxu0 0.0
  %1157 = vmatpush1.xpose.msra.mxu0 %v472
  %1158 = vmatprep.subr.mxu0 0.0
  %1159 = vmatpush1.xpose.msra.mxu0 %v469
  %1160 = vmatprep.subr.mxu0 0.0
  %1161 = vmatpush1.xpose.msra.mxu0 %v466
  %1162 = vmatprep.subr.mxu0 0.0
  %1163 = vmatpush1.xpose.msra.mxu0 %v463
  %1164 = vmatprep.subr.mxu0 0.0
  %1165 = vmatpush1.xpose.msra.mxu0 %v460
  %1166 = vmatprep.subr.mxu0 0.0
  %1167 = vmatpush1.xpose.msra.mxu0 %v457
  %1168 = vmatprep.subr.mxu0 0.0
  %1169 = vmatpush1.xpose.msra.mxu0 %v454
  %1170 = vmatprep.subr.mxu0 0.0
  %1171 = vmatpush1.xpose.msra.mxu0 %v451
  %1172 = vmatprep.subr.mxu0 0.0
  %1173 = vmatpush2.xpose.msra.mxu0 0.0
  %1174 = vmatprep.subr.mxu0 0.0
  %1175 = vmatpush2.xpose.msra.mxu0 0.0
  %1176 = vmatprep.subr.mxu0 0.0
  %1177 = vmatpush2.xpose.msra.mxu0 0.0
  %1178 = vmatprep.subr.mxu0 0.0
  %1179 = vmatpush2.xpose.msra.mxu0 0.0
  %1180 = vmatprep.subr.mxu0 0.0
  %1181 = vmatpush2.xpose.msra.mxu0 0.0
  %1182 = vmatprep.subr.mxu0 0.0
  %1183 = vmatpush2.xpose.msra.mxu0 0.0
  %1184 = vmatprep.subr.mxu0 0.0
  %1185 = vmatpush2.xpose.msra.mxu0 0.0
  %1186 = vmatprep.subr.mxu0 0.0
  %1187 = vmatpush2.xpose.msra.mxu0 0.0
  %1188 = vmatprep.subr.mxu0 0.0
  %1189 = vmatpush2.xpose.msra.mxu0 0.0
  %1190 = vmatprep.subr.mxu0 0.0
  %1191 = vmatpush2.xpose.msra.mxu0 0.0
  %1192 = vmatprep.subr.mxu0 0.0
  %1193 = vmatpush2.xpose.msra.mxu0 0.0
  %1194 = vmatprep.subr.mxu0 0.0
  %1195 = vmatpush2.xpose.msra.mxu0 0.0
  %1196 = vmatprep.subr.mxu0 0.0
  %1197 = vmatpush2.xpose.msra.mxu0 0.0
  %1198 = vmatprep.subr.mxu0 0.0
  %1199 = vmatpush2.xpose.msra.mxu0 0.0
  %1200 = vmatprep.subr.mxu0 0.0
  %1201 = vmatpush2.xpose.msra.mxu0 0.0
  %1202 = vmatprep.subr.mxu0 0.0
  %1203 = vmatpush2.xpose.msra.mxu0 0.0
  %1204 = vmatprep.mubr.f32.mxu0 0.0
  %1205 = vmatmul.mubr.f32.gmra.mxu0 %v1138
  %v1206 = vpop.f32.mrf.mxu0
  %v1207 = vadd.f32 0.0, %v1206
  %v1208 = vpop.f32.mrf.mxu0
  %1209 = vdwg.mxu0
  %v1210 = vadd.f32 %v377, %v1207
  %v1211 = vxor.u32 %v1210, 2147483648
  %v1212 = vmul.f32 %v1211, 1.442695
  %v1213 = vpow.pop %v1212
  %v1214 = vadd.f32 %v1213, 1.0
  %v1215 = vrcp.pop %v1214
  %v1216 = vmul.f32 1.0, %v1215
  %v1217 = vtanh.pop %v1210
  %v1218 = vmul.f32 %v1216, %v1121
  %1220 = vrot.lane.b32.xlu0 %v1217, 64
  %v1221 = vpop.permute.xlu0 %1220
  %v1223 = vmul.f32 %v1216, %v1221
  %1225 = vrot.lane.b32.xlu0 %v1223, 32
  %v1226 = vpop.permute.xlu0 %1225
  %v1228 = vadd.f32 %v1218, %v1226
  %v1229 = vtanh.pop %v1228
  %1231 = vrot.lane.b32.xlu0 %v1229, 64
  %v1232 = vpop.permute.xlu0 %1231
  %v1234 = vmul.f32 %v1216, %v1232
  %v1237 = vunpack.c.l.s4 1983009808
  %v1238 = vunpack.c.0.s8 %v1237
  %v1239 = vlaneseq
  %v1240 = vshrl.u32 %v1239, 7
  %v1241 = vsub.s32 %v1238, %v1240
  %v1242 = vrot.slane %v1234, %v1241
  %1243 = vrot.lane.b32.xlu0 %v1242, 32
  %v1244 = vpop.permute.xlu0 %1243
  %v1245 = vsel %vm446, %v1244, 0
  %1247 = vmatprep.subr.mxu0 0.0
  %1248 = vmatpush1.xpose.msra.mxu0 %v496
  %1249 = vmatprep.subr.mxu0 0.0
  %1250 = vmatpush1.xpose.msra.mxu0 %v493
  %1251 = vmatprep.subr.mxu0 0.0
  %1252 = vmatpush1.xpose.msra.mxu0 %v490
  %1253 = vmatprep.subr.mxu0 0.0
  %1254 = vmatpush1.xpose.msra.mxu0 %v487
  %1255 = vmatprep.subr.mxu0 0.0
  %1256 = vmatpush1.xpose.msra.mxu0 %v484
  %1257 = vmatprep.subr.mxu0 0.0
  %1258 = vmatpush1.xpose.msra.mxu0 %v481
  %1259 = vmatprep.subr.mxu0 0.0
  %1260 = vmatpush1.xpose.msra.mxu0 %v478
  %1261 = vmatprep.subr.mxu0 0.0
  %1262 = vmatpush1.xpose.msra.mxu0 %v475
  %1263 = vmatprep.subr.mxu0 0.0
  %1264 = vmatpush1.xpose.msra.mxu0 %v472
  %1265 = vmatprep.subr.mxu0 0.0
  %1266 = vmatpush1.xpose.msra.mxu0 %v469
  %1267 = vmatprep.subr.mxu0 0.0
  %1268 = vmatpush1.xpose.msra.mxu0 %v466
  %1269 = vmatprep.subr.mxu0 0.0
  %1270 = vmatpush1.xpose.msra.mxu0 %v463
  %1271 = vmatprep.subr.mxu0 0.0
  %1272 = vmatpush1.xpose.msra.mxu0 %v460
  %1273 = vmatprep.subr.mxu0 0.0
  %1274 = vmatpush1.xpose.msra.mxu0 %v457
  %1275 = vmatprep.subr.mxu0 0.0
  %1276 = vmatpush1.xpose.msra.mxu0 %v454
  %1277 = vmatprep.subr.mxu0 0.0
  %1278 = vmatpush1.xpose.msra.mxu0 %v451
  %1279 = vmatprep.subr.mxu0 0.0
  %1280 = vmatpush2.xpose.msra.mxu0 0.0
  %1281 = vmatprep.subr.mxu0 0.0
  %1282 = vmatpush2.xpose.msra.mxu0 0.0
  %1283 = vmatprep.subr.mxu0 0.0
  %1284 = vmatpush2.xpose.msra.mxu0 0.0
  %1285 = vmatprep.subr.mxu0 0.0
  %1286 = vmatpush2.xpose.msra.mxu0 0.0
  %1287 = vmatprep.subr.mxu0 0.0
  %1288 = vmatpush2.xpose.msra.mxu0 0.0
  %1289 = vmatprep.subr.mxu0 0.0
  %1290 = vmatpush2.xpose.msra.mxu0 0.0
  %1291 = vmatprep.subr.mxu0 0.0
  %1292 = vmatpush2.xpose.msra.mxu0 0.0
  %1293 = vmatprep.subr.mxu0 0.0
  %1294 = vmatpush2.xpose.msra.mxu0 0.0
  %1295 = vmatprep.subr.mxu0 0.0
  %1296 = vmatpush2.xpose.msra.mxu0 0.0
  %1297 = vmatprep.subr.mxu0 0.0
  %1298 = vmatpush2.xpose.msra.mxu0 0.0
  %1299 = vmatprep.subr.mxu0 0.0
  %1300 = vmatpush2.xpose.msra.mxu0 0.0
  %1301 = vmatprep.subr.mxu0 0.0
  %1302 = vmatpush2.xpose.msra.mxu0 0.0
  %1303 = vmatprep.subr.mxu0 0.0
  %1304 = vmatpush2.xpose.msra.mxu0 0.0
  %1305 = vmatprep.subr.mxu0 0.0
  %1306 = vmatpush2.xpose.msra.mxu0 0.0
  %1307 = vmatprep.subr.mxu0 0.0
  %1308 = vmatpush2.xpose.msra.mxu0 0.0
  %1309 = vmatprep.subr.mxu0 0.0
  %1310 = vmatpush2.xpose.msra.mxu0 0.0
  %1311 = vmatprep.mubr.f32.mxu0 0.0
  %1312 = vmatmul.mubr.f32.gmra.mxu0 %v1245
  %v1313 = vpop.f32.mrf.mxu0
  %v1314 = vadd.f32 0.0, %v1313
  %v1315 = vpop.f32.mrf.mxu0
  %1316 = vdwg.mxu0
  %v1317 = vadd.f32 %v379, %v1314
  %v1318 = vxor.u32 %v1317, 2147483648
  %v1319 = vmul.f32 %v1318, 1.442695
  %v1320 = vpow.pop %v1319
  %v1321 = vadd.f32 %v1320, 1.0
  %v1322 = vrcp.pop %v1321
  %v1323 = vmul.f32 1.0, %v1322
  %v1324 = vtanh.pop %v1317
  %v1325 = vmul.f32 %v1323, %v1228
  %1327 = vrot.lane.b32.xlu0 %v1324, 64
  %v1328 = vpop.permute.xlu0 %1327
  %v1330 = vmul.f32 %v1323, %v1328
  %1332 = vrot.lane.b32.xlu0 %v1330, 32
  %v1333 = vpop.permute.xlu0 %1332
  %v1335 = vadd.f32 %v1325, %v1333
  %v1336 = vtanh.pop %v1335
  %1338 = vrot.lane.b32.xlu0 %v1336, 64
  %v1339 = vpop.permute.xlu0 %1338
  %v1341 = vmul.f32 %v1323, %v1339
  %v1344 = vunpack.c.l.s4 1983009808
  %v1345 = vunpack.c.0.s8 %v1344
  %v1346 = vlaneseq
  %v1347 = vshrl.u32 %v1346, 7
  %v1348 = vsub.s32 %v1345, %v1347
  %v1349 = vrot.slane %v1341, %v1348
  %1350 = vrot.lane.b32.xlu0 %v1349, 32
  %v1351 = vpop.permute.xlu0 %1350
  %v1352 = vsel %vm446, %v1351, 0
  %1354 = vmatprep.subr.mxu0 0.0
  %1355 = vmatpush1.xpose.msra.mxu0 %v496
  %1356 = vmatprep.subr.mxu0 0.0
  %1357 = vmatpush1.xpose.msra.mxu0 %v493
  %1358 = vmatprep.subr.mxu0 0.0
  %1359 = vmatpush1.xpose.msra.mxu0 %v490
  %1360 = vmatprep.subr.mxu0 0.0
  %1361 = vmatpush1.xpose.msra.mxu0 %v487
  %1362 = vmatprep.subr.mxu0 0.0
  %1363 = vmatpush1.xpose.msra.mxu0 %v484
  %1364 = vmatprep.subr.mxu0 0.0
  %1365 = vmatpush1.xpose.msra.mxu0 %v481
  %1366 = vmatprep.subr.mxu0 0.0
  %1367 = vmatpush1.xpose.msra.mxu0 %v478
  %1368 = vmatprep.subr.mxu0 0.0
  %1369 = vmatpush1.xpose.msra.mxu0 %v475
  %1370 = vmatprep.subr.mxu0 0.0
  %1371 = vmatpush1.xpose.msra.mxu0 %v472
  %1372 = vmatprep.subr.mxu0 0.0
  %1373 = vmatpush1.xpose.msra.mxu0 %v469
  %1374 = vmatprep.subr.mxu0 0.0
  %1375 = vmatpush1.xpose.msra.mxu0 %v466
  %1376 = vmatprep.subr.mxu0 0.0
  %1377 = vmatpush1.xpose.msra.mxu0 %v463
  %1378 = vmatprep.subr.mxu0 0.0
  %1379 = vmatpush1.xpose.msra.mxu0 %v460
  %1380 = vmatprep.subr.mxu0 0.0
  %1381 = vmatpush1.xpose.msra.mxu0 %v457
  %1382 = vmatprep.subr.mxu0 0.0
  %1383 = vmatpush1.xpose.msra.mxu0 %v454
  %1384 = vmatprep.subr.mxu0 0.0
  %1385 = vmatpush1.xpose.msra.mxu0 %v451
  %1386 = vmatprep.subr.mxu0 0.0
  %1387 = vmatpush2.xpose.msra.mxu0 0.0
  %1388 = vmatprep.subr.mxu0 0.0
  %1389 = vmatpush2.xpose.msra.mxu0 0.0
  %1390 = vmatprep.subr.mxu0 0.0
  %1391 = vmatpush2.xpose.msra.mxu0 0.0
  %1392 = vmatprep.subr.mxu0 0.0
  %1393 = vmatpush2.xpose.msra.mxu0 0.0
  %1394 = vmatprep.subr.mxu0 0.0
  %1395 = vmatpush2.xpose.msra.mxu0 0.0
  %1396 = vmatprep.subr.mxu0 0.0
  %1397 = vmatpush2.xpose.msra.mxu0 0.0
  %1398 = vmatprep.subr.mxu0 0.0
  %1399 = vmatpush2.xpose.msra.mxu0 0.0
  %1400 = vmatprep.subr.mxu0 0.0
  %1401 = vmatpush2.xpose.msra.mxu0 0.0
  %1402 = vmatprep.subr.mxu0 0.0
  %1403 = vmatpush2.xpose.msra.mxu0 0.0
  %1404 = vmatprep.subr.mxu0 0.0
  %1405 = vmatpush2.xpose.msra.mxu0 0.0
  %1406 = vmatprep.subr.mxu0 0.0
  %1407 = vmatpush2.xpose.msra.mxu0 0.0
  %1408 = vmatprep.subr.mxu0 0.0
  %1409 = vmatpush2.xpose.msra.mxu0 0.0
  %1410 = vmatprep.subr.mxu0 0.0
  %1411 = vmatpush2.xpose.msra.mxu0 0.0
  %1412 = vmatprep.subr.mxu0 0.0
  %1413 = vmatpush2.xpose.msra.mxu0 0.0
  %1414 = vmatprep.subr.mxu0 0.0
  %1415 = vmatpush2.xpose.msra.mxu0 0.0
  %1416 = vmatprep.subr.mxu0 0.0
  %1417 = vmatpush2.xpose.msra.mxu0 0.0
  %1418 = vmatprep.mubr.f32.mxu0 0.0
  %1419 = vmatmul.mubr.f32.gmra.mxu0 %v1352
  %v1420 = vpop.f32.mrf.mxu0
  %v1421 = vadd.f32 0.0, %v1420
  %v1422 = vpop.f32.mrf.mxu0
  %1423 = vdwg.mxu0
  %v1424 = vadd.f32 %v387, %v1421
  %v1425 = vxor.u32 %v1424, 2147483648
  %v1426 = vmul.f32 %v1425, 1.442695
  %v1427 = vpow.pop %v1426
  %v1428 = vadd.f32 %v1427, 1.0
  %v1429 = vrcp.pop %v1428
  %v1430 = vmul.f32 1.0, %v1429
  %v1431 = vtanh.pop %v1424
  %v1432 = vmul.f32 %v1430, %v1335
  %1434 = vrot.lane.b32.xlu0 %v1431, 64
  %v1435 = vpop.permute.xlu0 %1434
  %v1437 = vmul.f32 %v1430, %v1435
  %1439 = vrot.lane.b32.xlu0 %v1437, 32
  %v1440 = vpop.permute.xlu0 %1439
  %v1442 = vadd.f32 %v1432, %v1440
  %v1443 = vtanh.pop %v1442
  %1445 = vrot.lane.b32.xlu0 %v1443, 64
  %v1446 = vpop.permute.xlu0 %1445
  %v1448 = vmul.f32 %v1430, %v1446
  %v1451 = vunpack.c.l.s4 1983009808
  %v1452 = vunpack.c.0.s8 %v1451
  %v1453 = vlaneseq
  %v1454 = vshrl.u32 %v1453, 7
  %v1455 = vsub.s32 %v1452, %v1454
  %v1456 = vrot.slane %v1448, %v1455
  %1457 = vrot.lane.b32.xlu0 %v1456, 32
  %v1458 = vpop.permute.xlu0 %1457
  %v1459 = vsel %vm446, %v1458, 0
  %1461 = vmatprep.subr.mxu0 0.0
  %1462 = vmatpush1.xpose.msra.mxu0 %v496
  %1463 = vmatprep.subr.mxu0 0.0
  %1464 = vmatpush1.xpose.msra.mxu0 %v493
  %1465 = vmatprep.subr.mxu0 0.0
  %1466 = vmatpush1.xpose.msra.mxu0 %v490
  %1467 = vmatprep.subr.mxu0 0.0
  %1468 = vmatpush1.xpose.msra.mxu0 %v487
  %1469 = vmatprep.subr.mxu0 0.0
  %1470 = vmatpush1.xpose.msra.mxu0 %v484
  %1471 = vmatprep.subr.mxu0 0.0
  %1472 = vmatpush1.xpose.msra.mxu0 %v481
  %1473 = vmatprep.subr.mxu0 0.0
  %1474 = vmatpush1.xpose.msra.mxu0 %v478
  %1475 = vmatprep.subr.mxu0 0.0
  %1476 = vmatpush1.xpose.msra.mxu0 %v475
  %1477 = vmatprep.subr.mxu0 0.0
  %1478 = vmatpush1.xpose.msra.mxu0 %v472
  %1479 = vmatprep.subr.mxu0 0.0
  %1480 = vmatpush1.xpose.msra.mxu0 %v469
  %1481 = vmatprep.subr.mxu0 0.0
  %1482 = vmatpush1.xpose.msra.mxu0 %v466
  %1483 = vmatprep.subr.mxu0 0.0
  %1484 = vmatpush1.xpose.msra.mxu0 %v463
  %1485 = vmatprep.subr.mxu0 0.0
  %1486 = vmatpush1.xpose.msra.mxu0 %v460
  %1487 = vmatprep.subr.mxu0 0.0
  %1488 = vmatpush1.xpose.msra.mxu0 %v457
  %1489 = vmatprep.subr.mxu0 0.0
  %1490 = vmatpush1.xpose.msra.mxu0 %v454
  %1491 = vmatprep.subr.mxu0 0.0
  %1492 = vmatpush1.xpose.msra.mxu0 %v451
  %1493 = vmatprep.subr.mxu0 0.0
  %1494 = vmatpush2.xpose.msra.mxu0 0.0
  %1495 = vmatprep.subr.mxu0 0.0
  %1496 = vmatpush2.xpose.msra.mxu0 0.0
  %1497 = vmatprep.subr.mxu0 0.0
  %1498 = vmatpush2.xpose.msra.mxu0 0.0
  %1499 = vmatprep.subr.mxu0 0.0
  %1500 = vmatpush2.xpose.msra.mxu0 0.0
  %1501 = vmatprep.subr.mxu0 0.0
  %1502 = vmatpush2.xpose.msra.mxu0 0.0
  %1503 = vmatprep.subr.mxu0 0.0
  %1504 = vmatpush2.xpose.msra.mxu0 0.0
  %1505 = vmatprep.subr.mxu0 0.0
  %1506 = vmatpush2.xpose.msra.mxu0 0.0
  %1507 = vmatprep.subr.mxu0 0.0
  %1508 = vmatpush2.xpose.msra.mxu0 0.0
  %1509 = vmatprep.subr.mxu0 0.0
  %1510 = vmatpush2.xpose.msra.mxu0 0.0
  %1511 = vmatprep.subr.mxu0 0.0
  %1512 = vmatpush2.xpose.msra.mxu0 0.0
  %1513 = vmatprep.subr.mxu0 0.0
  %1514 = vmatpush2.xpose.msra.mxu0 0.0
  %1515 = vmatprep.subr.mxu0 0.0
  %1516 = vmatpush2.xpose.msra.mxu0 0.0
  %1517 = vmatprep.subr.mxu0 0.0
  %1518 = vmatpush2.xpose.msra.mxu0 0.0
  %1519 = vmatprep.subr.mxu0 0.0
  %1520 = vmatpush2.xpose.msra.mxu0 0.0
  %1521 = vmatprep.subr.mxu0 0.0
  %1522 = vmatpush2.xpose.msra.mxu0 0.0
  %1523 = vmatprep.subr.mxu0 0.0
  %1524 = vmatpush2.xpose.msra.mxu0 0.0
  %1525 = vmatprep.mubr.f32.mxu0 0.0
  %1526 = vmatmul.mubr.f32.gmra.mxu0 %v1459
  %v1527 = vpop.f32.mrf.mxu0
  %v1528 = vadd.f32 0.0, %v1527
  %v1529 = vpop.f32.mrf.mxu0
  %1530 = vdwg.mxu0
  %v1531 = vadd.f32 %v395, %v1528
  %v1532 = vxor.u32 %v1531, 2147483648
  %v1533 = vmul.f32 %v1532, 1.442695
  %v1534 = vpow.pop %v1533
  %v1535 = vadd.f32 %v1534, 1.0
  %v1536 = vrcp.pop %v1535
  %v1537 = vmul.f32 1.0, %v1536
  %v1538 = vtanh.pop %v1531
  %v1539 = vmul.f32 %v1537, %v1442
  %1541 = vrot.lane.b32.xlu0 %v1538, 64
  %v1542 = vpop.permute.xlu0 %1541
  %v1544 = vmul.f32 %v1537, %v1542
  %1546 = vrot.lane.b32.xlu0 %v1544, 32
  %v1547 = vpop.permute.xlu0 %1546
  %v1549 = vadd.f32 %v1539, %v1547
  %v1550 = vtanh.pop %v1549
  %1552 = vrot.lane.b32.xlu0 %v1550, 64
  %v1553 = vpop.permute.xlu0 %1552
  %v1555 = vmul.f32 %v1537, %v1553
  %v1558 = vunpack.c.l.s4 1983009808
  %v1559 = vunpack.c.0.s8 %v1558
  %v1560 = vlaneseq
  %v1561 = vshrl.u32 %v1560, 7
  %v1562 = vsub.s32 %v1559, %v1561
  %v1563 = vrot.slane %v1555, %v1562
  %1564 = vrot.lane.b32.xlu0 %v1563, 32
  %v1565 = vpop.permute.xlu0 %1564
  %v1566 = vsel %vm446, %v1565, 0
  %1568 = vmatprep.subr.mxu0 0.0
  %1569 = vmatpush1.xpose.msra.mxu0 %v496
  %1570 = vmatprep.subr.mxu0 0.0
  %1571 = vmatpush1.xpose.msra.mxu0 %v493
  %1572 = vmatprep.subr.mxu0 0.0
  %1573 = vmatpush1.xpose.msra.mxu0 %v490
  %1574 = vmatprep.subr.mxu0 0.0
  %1575 = vmatpush1.xpose.msra.mxu0 %v487
  %1576 = vmatprep.subr.mxu0 0.0
  %1577 = vmatpush1.xpose.msra.mxu0 %v484
  %1578 = vmatprep.subr.mxu0 0.0
  %1579 = vmatpush1.xpose.msra.mxu0 %v481
  %1580 = vmatprep.subr.mxu0 0.0
  %1581 = vmatpush1.xpose.msra.mxu0 %v478
  %1582 = vmatprep.subr.mxu0 0.0
  %1583 = vmatpush1.xpose.msra.mxu0 %v475
  %1584 = vmatprep.subr.mxu0 0.0
  %1585 = vmatpush1.xpose.msra.mxu0 %v472
  %1586 = vmatprep.subr.mxu0 0.0
  %1587 = vmatpush1.xpose.msra.mxu0 %v469
  %1588 = vmatprep.subr.mxu0 0.0
  %1589 = vmatpush1.xpose.msra.mxu0 %v466
  %1590 = vmatprep.subr.mxu0 0.0
  %1591 = vmatpush1.xpose.msra.mxu0 %v463
  %1592 = vmatprep.subr.mxu0 0.0
  %1593 = vmatpush1.xpose.msra.mxu0 %v460
  %1594 = vmatprep.subr.mxu0 0.0
  %1595 = vmatpush1.xpose.msra.mxu0 %v457
  %1596 = vmatprep.subr.mxu0 0.0
  %1597 = vmatpush1.xpose.msra.mxu0 %v454
  %1598 = vmatprep.subr.mxu0 0.0
  %1599 = vmatpush1.xpose.msra.mxu0 %v451
  %1600 = vmatprep.subr.mxu0 0.0
  %1601 = vmatpush2.xpose.msra.mxu0 0.0
  %1602 = vmatprep.subr.mxu0 0.0
  %1603 = vmatpush2.xpose.msra.mxu0 0.0
  %1604 = vmatprep.subr.mxu0 0.0
  %1605 = vmatpush2.xpose.msra.mxu0 0.0
  %1606 = vmatprep.subr.mxu0 0.0
  %1607 = vmatpush2.xpose.msra.mxu0 0.0
  %1608 = vmatprep.subr.mxu0 0.0
  %1609 = vmatpush2.xpose.msra.mxu0 0.0
  %1610 = vmatprep.subr.mxu0 0.0
  %1611 = vmatpush2.xpose.msra.mxu0 0.0
  %1612 = vmatprep.subr.mxu0 0.0
  %1613 = vmatpush2.xpose.msra.mxu0 0.0
  %1614 = vmatprep.subr.mxu0 0.0
  %1615 = vmatpush2.xpose.msra.mxu0 0.0
  %1616 = vmatprep.subr.mxu0 0.0
  %1617 = vmatpush2.xpose.msra.mxu0 0.0
  %1618 = vmatprep.subr.mxu0 0.0
  %1619 = vmatpush2.xpose.msra.mxu0 0.0
  %1620 = vmatprep.subr.mxu0 0.0
  %1621 = vmatpush2.xpose.msra.mxu0 0.0
  %1622 = vmatprep.subr.mxu0 0.0
  %1623 = vmatpush2.xpose.msra.mxu0 0.0
  %1624 = vmatprep.subr.mxu0 0.0
  %1625 = vmatpush2.xpose.msra.mxu0 0.0
  %1626 = vmatprep.subr.mxu0 0.0
  %1627 = vmatpush2.xpose.msra.mxu0 0.0
  %1628 = vmatprep.subr.mxu0 0.0
  %1629 = vmatpush2.xpose.msra.mxu0 0.0
  %1630 = vmatprep.subr.mxu0 0.0
  %1631 = vmatpush2.xpose.msra.mxu0 0.0
  %1632 = vmatprep.mubr.f32.mxu0 0.0
  %1633 = vmatmul.mubr.f32.gmra.mxu0 %v1566
  %v1634 = vpop.f32.mrf.mxu0
  %v1635 = vadd.f32 0.0, %v1634
  %v1636 = vpop.f32.mrf.mxu0
  %1637 = vdwg.mxu0
  %v1638 = vadd.f32 %v394, %v1635
  %v1639 = vxor.u32 %v1638, 2147483648
  %v1640 = vmul.f32 %v1639, 1.442695
  %v1641 = vpow.pop %v1640
  %v1642 = vadd.f32 %v1641, 1.0
  %v1643 = vrcp.pop %v1642
  %v1644 = vmul.f32 1.0, %v1643
  %v1645 = vtanh.pop %v1638
  %v1646 = vmul.f32 %v1644, %v1549
  %1648 = vrot.lane.b32.xlu0 %v1645, 64
  %v1649 = vpop.permute.xlu0 %1648
  %v1651 = vmul.f32 %v1644, %v1649
  %1653 = vrot.lane.b32.xlu0 %v1651, 32
  %v1654 = vpop.permute.xlu0 %1653
  %v1656 = vadd.f32 %v1646, %v1654
  %v1657 = vtanh.pop %v1656
  %1659 = vrot.lane.b32.xlu0 %v1657, 64
  %v1660 = vpop.permute.xlu0 %1659
  %v1662 = vmul.f32 %v1644, %v1660
  %v1665 = vunpack.c.l.s4 1983009808
  %v1666 = vunpack.c.0.s8 %v1665
  %v1667 = vlaneseq
  %v1668 = vshrl.u32 %v1667, 7
  %v1669 = vsub.s32 %v1666, %v1668
  %v1670 = vrot.slane %v1662, %v1669
  %1671 = vrot.lane.b32.xlu0 %v1670, 32
  %v1672 = vpop.permute.xlu0 %1671
  %v1673 = vsel %vm446, %v1672, 0
  %1675 = vmatprep.subr.mxu0 0.0
  %1676 = vmatpush1.xpose.msra.mxu0 %v496
  %1677 = vmatprep.subr.mxu0 0.0
  %1678 = vmatpush1.xpose.msra.mxu0 %v493
  %1679 = vmatprep.subr.mxu0 0.0
  %1680 = vmatpush1.xpose.msra.mxu0 %v490
  %1681 = vmatprep.subr.mxu0 0.0
  %1682 = vmatpush1.xpose.msra.mxu0 %v487
  %1683 = vmatprep.subr.mxu0 0.0
  %1684 = vmatpush1.xpose.msra.mxu0 %v484
  %1685 = vmatprep.subr.mxu0 0.0
  %1686 = vmatpush1.xpose.msra.mxu0 %v481
  %1687 = vmatprep.subr.mxu0 0.0
  %1688 = vmatpush1.xpose.msra.mxu0 %v478
  %1689 = vmatprep.subr.mxu0 0.0
  %1690 = vmatpush1.xpose.msra.mxu0 %v475
  %1691 = vmatprep.subr.mxu0 0.0
  %1692 = vmatpush1.xpose.msra.mxu0 %v472
  %1693 = vmatprep.subr.mxu0 0.0
  %1694 = vmatpush1.xpose.msra.mxu0 %v469
  %1695 = vmatprep.subr.mxu0 0.0
  %1696 = vmatpush1.xpose.msra.mxu0 %v466
  %1697 = vmatprep.subr.mxu0 0.0
  %1698 = vmatpush1.xpose.msra.mxu0 %v463
  %1699 = vmatprep.subr.mxu0 0.0
  %1700 = vmatpush1.xpose.msra.mxu0 %v460
  %1701 = vmatprep.subr.mxu0 0.0
  %1702 = vmatpush1.xpose.msra.mxu0 %v457
  %1703 = vmatprep.subr.mxu0 0.0
  %1704 = vmatpush1.xpose.msra.mxu0 %v454
  %1705 = vmatprep.subr.mxu0 0.0
  %1706 = vmatpush1.xpose.msra.mxu0 %v451
  %1707 = vmatprep.subr.mxu0 0.0
  %1708 = vmatpush2.xpose.msra.mxu0 0.0
  %1709 = vmatprep.subr.mxu0 0.0
  %1710 = vmatpush2.xpose.msra.mxu0 0.0
  %1711 = vmatprep.subr.mxu0 0.0
  %1712 = vmatpush2.xpose.msra.mxu0 0.0
  %1713 = vmatprep.subr.mxu0 0.0
  %1714 = vmatpush2.xpose.msra.mxu0 0.0
  %1715 = vmatprep.subr.mxu0 0.0
  %1716 = vmatpush2.xpose.msra.mxu0 0.0
  %1717 = vmatprep.subr.mxu0 0.0
  %1718 = vmatpush2.xpose.msra.mxu0 0.0
  %1719 = vmatprep.subr.mxu0 0.0
  %1720 = vmatpush2.xpose.msra.mxu0 0.0
  %1721 = vmatprep.subr.mxu0 0.0
  %1722 = vmatpush2.xpose.msra.mxu0 0.0
  %1723 = vmatprep.subr.mxu0 0.0
  %1724 = vmatpush2.xpose.msra.mxu0 0.0
  %1725 = vmatprep.subr.mxu0 0.0
  %1726 = vmatpush2.xpose.msra.mxu0 0.0
  %1727 = vmatprep.subr.mxu0 0.0
  %1728 = vmatpush2.xpose.msra.mxu0 0.0
  %1729 = vmatprep.subr.mxu0 0.0
  %1730 = vmatpush2.xpose.msra.mxu0 0.0
  %1731 = vmatprep.subr.mxu0 0.0
  %1732 = vmatpush2.xpose.msra.mxu0 0.0
  %1733 = vmatprep.subr.mxu0 0.0
  %1734 = vmatpush2.xpose.msra.mxu0 0.0
  %1735 = vmatprep.subr.mxu0 0.0
  %1736 = vmatpush2.xpose.msra.mxu0 0.0
  %1737 = vmatprep.subr.mxu0 0.0
  %1738 = vmatpush2.xpose.msra.mxu0 0.0
  %1739 = vmatprep.mubr.f32.mxu0 0.0
  %1740 = vmatmul.mubr.f32.gmra.mxu0 %v1673
  %v1741 = vpop.f32.mrf.mxu0
  %v1742 = vadd.f32 0.0, %v1741
  %v1743 = vpop.f32.mrf.mxu0
  %1744 = vdwg.mxu0
  %v1745 = vadd.f32 %v396, %v1742
  %v1746 = vxor.u32 %v1745, 2147483648
  %v1747 = vmul.f32 %v1746, 1.442695
  %v1748 = vpow.pop %v1747
  %v1749 = vadd.f32 %v1748, 1.0
  %v1750 = vrcp.pop %v1749
  %v1751 = vmul.f32 1.0, %v1750
  %v1752 = vtanh.pop %v1745
  %v1753 = vmul.f32 %v1751, %v1656
  %1755 = vrot.lane.b32.xlu0 %v1752, 64
  %v1756 = vpop.permute.xlu0 %1755
  %v1758 = vmul.f32 %v1751, %v1756
  %1760 = vrot.lane.b32.xlu0 %v1758, 32
  %v1761 = vpop.permute.xlu0 %1760
  %v1763 = vadd.f32 %v1753, %v1761
  %v1764 = vtanh.pop %v1763
  %1766 = vrot.lane.b32.xlu0 %v1764, 64
  %v1767 = vpop.permute.xlu0 %1766
  %v1769 = vmul.f32 %v1751, %v1767
  %v1772 = vunpack.c.l.s4 1983009808
  %v1773 = vunpack.c.0.s8 %v1772
  %v1774 = vlaneseq
  %v1775 = vshrl.u32 %v1774, 7
  %v1776 = vsub.s32 %v1773, %v1775
  %v1777 = vrot.slane %v1769, %v1776
  %1778 = vrot.lane.b32.xlu0 %v1777, 32
  %v1779 = vpop.permute.xlu0 %1778
  %v1780 = vsel %vm446, %v1779, 0
  %1782 = vmatprep.subr.mxu0 0.0
  %1783 = vmatpush1.xpose.msra.mxu0 %v496
  %1784 = vmatprep.subr.mxu0 0.0
  %1785 = vmatpush1.xpose.msra.mxu0 %v493
  %1786 = vmatprep.subr.mxu0 0.0
  %1787 = vmatpush1.xpose.msra.mxu0 %v490
  %1788 = vmatprep.subr.mxu0 0.0
  %1789 = vmatpush1.xpose.msra.mxu0 %v487
  %1790 = vmatprep.subr.mxu0 0.0
  %1791 = vmatpush1.xpose.msra.mxu0 %v484
  %1792 = vmatprep.subr.mxu0 0.0
  %1793 = vmatpush1.xpose.msra.mxu0 %v481
  %1794 = vmatprep.subr.mxu0 0.0
  %1795 = vmatpush1.xpose.msra.mxu0 %v478
  %1796 = vmatprep.subr.mxu0 0.0
  %1797 = vmatpush1.xpose.msra.mxu0 %v475
  %1798 = vmatprep.subr.mxu0 0.0
  %1799 = vmatpush1.xpose.msra.mxu0 %v472
  %1800 = vmatprep.subr.mxu0 0.0
  %1801 = vmatpush1.xpose.msra.mxu0 %v469
  %1802 = vmatprep.subr.mxu0 0.0
  %1803 = vmatpush1.xpose.msra.mxu0 %v466
  %1804 = vmatprep.subr.mxu0 0.0
  %1805 = vmatpush1.xpose.msra.mxu0 %v463
  %1806 = vmatprep.subr.mxu0 0.0
  %1807 = vmatpush1.xpose.msra.mxu0 %v460
  %1808 = vmatprep.subr.mxu0 0.0
  %1809 = vmatpush1.xpose.msra.mxu0 %v457
  %1810 = vmatprep.subr.mxu0 0.0
  %1811 = vmatpush1.xpose.msra.mxu0 %v454
  %1812 = vmatprep.subr.mxu0 0.0
  %1813 = vmatpush1.xpose.msra.mxu0 %v451
  %1814 = vmatprep.subr.mxu0 0.0
  %1815 = vmatpush2.xpose.msra.mxu0 0.0
  %1816 = vmatprep.subr.mxu0 0.0
  %1817 = vmatpush2.xpose.msra.mxu0 0.0
  %1818 = vmatprep.subr.mxu0 0.0
  %1819 = vmatpush2.xpose.msra.mxu0 0.0
  %1820 = vmatprep.subr.mxu0 0.0
  %1821 = vmatpush2.xpose.msra.mxu0 0.0
  %1822 = vmatprep.subr.mxu0 0.0
  %1823 = vmatpush2.xpose.msra.mxu0 0.0
  %1824 = vmatprep.subr.mxu0 0.0
  %1825 = vmatpush2.xpose.msra.mxu0 0.0
  %1826 = vmatprep.subr.mxu0 0.0
  %1827 = vmatpush2.xpose.msra.mxu0 0.0
  %1828 = vmatprep.subr.mxu0 0.0
  %1829 = vmatpush2.xpose.msra.mxu0 0.0
  %1830 = vmatprep.subr.mxu0 0.0
  %1831 = vmatpush2.xpose.msra.mxu0 0.0
  %1832 = vmatprep.subr.mxu0 0.0
  %1833 = vmatpush2.xpose.msra.mxu0 0.0
  %1834 = vmatprep.subr.mxu0 0.0
  %1835 = vmatpush2.xpose.msra.mxu0 0.0
  %1836 = vmatprep.subr.mxu0 0.0
  %1837 = vmatpush2.xpose.msra.mxu0 0.0
  %1838 = vmatprep.subr.mxu0 0.0
  %1839 = vmatpush2.xpose.msra.mxu0 0.0
  %1840 = vmatprep.subr.mxu0 0.0
  %1841 = vmatpush2.xpose.msra.mxu0 0.0
  %1842 = vmatprep.subr.mxu0 0.0
  %1843 = vmatpush2.xpose.msra.mxu0 0.0
  %1844 = vmatprep.subr.mxu0 0.0
  %1845 = vmatpush2.xpose.msra.mxu0 0.0
  %1846 = vmatprep.mubr.f32.mxu0 0.0
  %1847 = vmatmul.mubr.f32.gmra.mxu0 %v1780
  %v1848 = vpop.f32.mrf.mxu0
  %v1849 = vadd.f32 0.0, %v1848
  %v1850 = vpop.f32.mrf.mxu0
  %1851 = vdwg.mxu0
  %v1852 = vadd.f32 %v404, %v1849
  %v1853 = vxor.u32 %v1852, 2147483648
  %v1854 = vmul.f32 %v1853, 1.442695
  %v1855 = vpow.pop %v1854
  %v1856 = vadd.f32 %v1855, 1.0
  %v1857 = vrcp.pop %v1856
  %v1858 = vmul.f32 1.0, %v1857
  %v1859 = vtanh.pop %v1852
  %v1860 = vmul.f32 %v1858, %v1763
  %1862 = vrot.lane.b32.xlu0 %v1859, 64
  %v1863 = vpop.permute.xlu0 %1862
  %v1865 = vmul.f32 %v1858, %v1863
  %1867 = vrot.lane.b32.xlu0 %v1865, 32
  %v1868 = vpop.permute.xlu0 %1867
  %v1870 = vadd.f32 %v1860, %v1868
  %v1871 = vtanh.pop %v1870
  %1873 = vrot.lane.b32.xlu0 %v1871, 64
  %v1874 = vpop.permute.xlu0 %1873
  %v1876 = vmul.f32 %v1858, %v1874
  %v1879 = vunpack.c.l.s4 1983009808
  %v1880 = vunpack.c.0.s8 %v1879
  %v1881 = vlaneseq
  %v1882 = vshrl.u32 %v1881, 7
  %v1883 = vsub.s32 %v1880, %v1882
  %v1884 = vrot.slane %v1876, %v1883
  %1885 = vrot.lane.b32.xlu0 %v1884, 32
  %v1886 = vpop.permute.xlu0 %1885
  %v1887 = vsel %vm446, %v1886, 0
  %1889 = vmatprep.subr.mxu0 0.0
  %1890 = vmatpush1.xpose.msra.mxu0 %v496
  %1891 = vmatprep.subr.mxu0 0.0
  %1892 = vmatpush1.xpose.msra.mxu0 %v493
  %1893 = vmatprep.subr.mxu0 0.0
  %1894 = vmatpush1.xpose.msra.mxu0 %v490
  %1895 = vmatprep.subr.mxu0 0.0
  %1896 = vmatpush1.xpose.msra.mxu0 %v487
  %1897 = vmatprep.subr.mxu0 0.0
  %1898 = vmatpush1.xpose.msra.mxu0 %v484
  %1899 = vmatprep.subr.mxu0 0.0
  %1900 = vmatpush1.xpose.msra.mxu0 %v481
  %1901 = vmatprep.subr.mxu0 0.0
  %1902 = vmatpush1.xpose.msra.mxu0 %v478
  %1903 = vmatprep.subr.mxu0 0.0
  %1904 = vmatpush1.xpose.msra.mxu0 %v475
  %1905 = vmatprep.subr.mxu0 0.0
  %1906 = vmatpush1.xpose.msra.mxu0 %v472
  %1907 = vmatprep.subr.mxu0 0.0
  %1908 = vmatpush1.xpose.msra.mxu0 %v469
  %1909 = vmatprep.subr.mxu0 0.0
  %1910 = vmatpush1.xpose.msra.mxu0 %v466
  %1911 = vmatprep.subr.mxu0 0.0
  %1912 = vmatpush1.xpose.msra.mxu0 %v463
  %1913 = vmatprep.subr.mxu0 0.0
  %1914 = vmatpush1.xpose.msra.mxu0 %v460
  %1915 = vmatprep.subr.mxu0 0.0
  %1916 = vmatpush1.xpose.msra.mxu0 %v457
  %1917 = vmatprep.subr.mxu0 0.0
  %1918 = vmatpush1.xpose.msra.mxu0 %v454
  %1919 = vmatprep.subr.mxu0 0.0
  %1920 = vmatpush1.xpose.msra.mxu0 %v451
  %1921 = vmatprep.subr.mxu0 0.0
  %1922 = vmatpush2.xpose.msra.mxu0 0.0
  %1923 = vmatprep.subr.mxu0 0.0
  %1924 = vmatpush2.xpose.msra.mxu0 0.0
  %1925 = vmatprep.subr.mxu0 0.0
  %1926 = vmatpush2.xpose.msra.mxu0 0.0
  %1927 = vmatprep.subr.mxu0 0.0
  %1928 = vmatpush2.xpose.msra.mxu0 0.0
  %1929 = vmatprep.subr.mxu0 0.0
  %1930 = vmatpush2.xpose.msra.mxu0 0.0
  %1931 = vmatprep.subr.mxu0 0.0
  %1932 = vmatpush2.xpose.msra.mxu0 0.0
  %1933 = vmatprep.subr.mxu0 0.0
  %1934 = vmatpush2.xpose.msra.mxu0 0.0
  %1935 = vmatprep.subr.mxu0 0.0
  %1936 = vmatpush2.xpose.msra.mxu0 0.0
  %1937 = vmatprep.subr.mxu0 0.0
  %1938 = vmatpush2.xpose.msra.mxu0 0.0
  %1939 = vmatprep.subr.mxu0 0.0
  %1940 = vmatpush2.xpose.msra.mxu0 0.0
  %1941 = vmatprep.subr.mxu0 0.0
  %1942 = vmatpush2.xpose.msra.mxu0 0.0
  %1943 = vmatprep.subr.mxu0 0.0
  %1944 = vmatpush2.xpose.msra.mxu0 0.0
  %1945 = vmatprep.subr.mxu0 0.0
  %1946 = vmatpush2.xpose.msra.mxu0 0.0
  %1947 = vmatprep.subr.mxu0 0.0
  %1948 = vmatpush2.xpose.msra.mxu0 0.0
  %1949 = vmatprep.subr.mxu0 0.0
  %1950 = vmatpush2.xpose.msra.mxu0 0.0
  %1951 = vmatprep.subr.mxu0 0.0
  %1952 = vmatpush2.xpose.msra.mxu0 0.0
  %1953 = vmatprep.mubr.f32.mxu0 0.0
  %1954 = vmatmul.mubr.f32.gmra.mxu0 %v1887
  %v1955 = vpop.f32.mrf.mxu0
  %v1956 = vadd.f32 0.0, %v1955
  %v1957 = vpop.f32.mrf.mxu0
  %1958 = vdwg.mxu0
  %v1959 = vadd.f32 %v412, %v1956
  %v1960 = vxor.u32 %v1959, 2147483648
  %v1961 = vmul.f32 %v1960, 1.442695
  %v1962 = vpow.pop %v1961
  %v1963 = vadd.f32 %v1962, 1.0
  %v1964 = vrcp.pop %v1963
  %v1965 = vmul.f32 1.0, %v1964
  %v1966 = vtanh.pop %v1959
  %v1967 = vmul.f32 %v1965, %v1870
  %1969 = vrot.lane.b32.xlu0 %v1966, 64
  %v1970 = vpop.permute.xlu0 %1969
  %v1972 = vmul.f32 %v1965, %v1970
  %1974 = vrot.lane.b32.xlu0 %v1972, 32
  %v1975 = vpop.permute.xlu0 %1974
  %v1977 = vadd.f32 %v1967, %v1975
  %v1978 = vtanh.pop %v1977
  %1980 = vrot.lane.b32.xlu0 %v1978, 64
  %v1981 = vpop.permute.xlu0 %1980
  %v1983 = vmul.f32 %v1965, %v1981
  %v1986 = vunpack.c.l.s4 1983009808
  %v1987 = vunpack.c.0.s8 %v1986
  %v1988 = vlaneseq
  %v1989 = vshrl.u32 %v1988, 7
  %v1990 = vsub.s32 %v1987, %v1989
  %v1991 = vrot.slane %v1983, %v1990
  %1992 = vrot.lane.b32.xlu0 %v1991, 32
  %v1993 = vpop.permute.xlu0 %1992
  %v1994 = vsel %vm446, %v1993, 0
  %1996 = vmatprep.subr.mxu0 0.0
  %1997 = vmatpush1.xpose.msra.mxu0 %v496
  %1998 = vmatprep.subr.mxu0 0.0
  %1999 = vmatpush1.xpose.msra.mxu0 %v493
  %2000 = vmatprep.subr.mxu0 0.0
  %2001 = vmatpush1.xpose.msra.mxu0 %v490
  %2002 = vmatprep.subr.mxu0 0.0
  %2003 = vmatpush1.xpose.msra.mxu0 %v487
  %2004 = vmatprep.subr.mxu0 0.0
  %2005 = vmatpush1.xpose.msra.mxu0 %v484
  %2006 = vmatprep.subr.mxu0 0.0
  %2007 = vmatpush1.xpose.msra.mxu0 %v481
  %2008 = vmatprep.subr.mxu0 0.0
  %2009 = vmatpush1.xpose.msra.mxu0 %v478
  %2010 = vmatprep.subr.mxu0 0.0
  %2011 = vmatpush1.xpose.msra.mxu0 %v475
  %2012 = vmatprep.subr.mxu0 0.0
  %2013 = vmatpush1.xpose.msra.mxu0 %v472
  %2014 = vmatprep.subr.mxu0 0.0
  %2015 = vmatpush1.xpose.msra.mxu0 %v469
  %2016 = vmatprep.subr.mxu0 0.0
  %2017 = vmatpush1.xpose.msra.mxu0 %v466
  %2018 = vmatprep.subr.mxu0 0.0
  %2019 = vmatpush1.xpose.msra.mxu0 %v463
  %2020 = vmatprep.subr.mxu0 0.0
  %2021 = vmatpush1.xpose.msra.mxu0 %v460
  %2022 = vmatprep.subr.mxu0 0.0
  %2023 = vmatpush1.xpose.msra.mxu0 %v457
  %2024 = vmatprep.subr.mxu0 0.0
  %2025 = vmatpush1.xpose.msra.mxu0 %v454
  %2026 = vmatprep.subr.mxu0 0.0
  %2027 = vmatpush1.xpose.msra.mxu0 %v451
  %2028 = vmatprep.subr.mxu0 0.0
  %2029 = vmatpush2.xpose.msra.mxu0 0.0
  %2030 = vmatprep.subr.mxu0 0.0
  %2031 = vmatpush2.xpose.msra.mxu0 0.0
  %2032 = vmatprep.subr.mxu0 0.0
  %2033 = vmatpush2.xpose.msra.mxu0 0.0
  %2034 = vmatprep.subr.mxu0 0.0
  %2035 = vmatpush2.xpose.msra.mxu0 0.0
  %2036 = vmatprep.subr.mxu0 0.0
  %2037 = vmatpush2.xpose.msra.mxu0 0.0
  %2038 = vmatprep.subr.mxu0 0.0
  %2039 = vmatpush2.xpose.msra.mxu0 0.0
  %2040 = vmatprep.subr.mxu0 0.0
  %2041 = vmatpush2.xpose.msra.mxu0 0.0
  %2042 = vmatprep.subr.mxu0 0.0
  %2043 = vmatpush2.xpose.msra.mxu0 0.0
  %2044 = vmatprep.subr.mxu0 0.0
  %2045 = vmatpush2.xpose.msra.mxu0 0.0
  %2046 = vmatprep.subr.mxu0 0.0
  %2047 = vmatpush2.xpose.msra.mxu0 0.0
  %2048 = vmatprep.subr.mxu0 0.0
  %2049 = vmatpush2.xpose.msra.mxu0 0.0
  %2050 = vmatprep.subr.mxu0 0.0
  %2051 = vmatpush2.xpose.msra.mxu0 0.0
  %2052 = vmatprep.subr.mxu0 0.0
  %2053 = vmatpush2.xpose.msra.mxu0 0.0
  %2054 = vmatprep.subr.mxu0 0.0
  %2055 = vmatpush2.xpose.msra.mxu0 0.0
  %2056 = vmatprep.subr.mxu0 0.0
  %2057 = vmatpush2.xpose.msra.mxu0 0.0
  %2058 = vmatprep.subr.mxu0 0.0
  %2059 = vmatpush2.xpose.msra.mxu0 0.0
  %2060 = vmatprep.mubr.f32.mxu0 0.0
  %2061 = vmatmul.mubr.f32.gmra.mxu0 %v1994
  %v2062 = vpop.f32.mrf.mxu0
  %v2063 = vadd.f32 0.0, %v2062
  %v2064 = vpop.f32.mrf.mxu0
  %2065 = vdwg.mxu0
  %v2066 = vadd.f32 %v411, %v2063
  %v2067 = vxor.u32 %v2066, 2147483648
  %v2068 = vmul.f32 %v2067, 1.442695
  %v2069 = vpow.pop %v2068
  %v2070 = vadd.f32 %v2069, 1.0
  %v2071 = vrcp.pop %v2070
  %v2072 = vmul.f32 1.0, %v2071
  %v2073 = vtanh.pop %v2066
  %v2074 = vmul.f32 %v2072, %v1977
  %2076 = vrot.lane.b32.xlu0 %v2073, 64
  %v2077 = vpop.permute.xlu0 %2076
  %v2079 = vmul.f32 %v2072, %v2077
  %2081 = vrot.lane.b32.xlu0 %v2079, 32
  %v2082 = vpop.permute.xlu0 %2081
  %v2084 = vadd.f32 %v2074, %v2082
  %v2085 = vtanh.pop %v2084
  %2087 = vrot.lane.b32.xlu0 %v2085, 64
  %v2088 = vpop.permute.xlu0 %2087
  %v2090 = vmul.f32 %v2072, %v2088
  %v2093 = vunpack.c.l.s4 1983009808
  %v2094 = vunpack.c.0.s8 %v2093
  %v2095 = vlaneseq
  %v2096 = vshrl.u32 %v2095, 7
  %v2097 = vsub.s32 %v2094, %v2096
  %v2098 = vrot.slane %v2090, %v2097
  %2099 = vrot.lane.b32.xlu0 %v2098, 32
  %v2100 = vpop.permute.xlu0 %2099
  %v2101 = vsel %vm446, %v2100, 0
  %2103 = vmatprep.subr.mxu0 0.0
  %2104 = vmatpush1.xpose.msra.mxu0 %v496
  %2105 = vmatprep.subr.mxu0 0.0
  %2106 = vmatpush1.xpose.msra.mxu0 %v493
  %2107 = vmatprep.subr.mxu0 0.0
  %2108 = vmatpush1.xpose.msra.mxu0 %v490
  %2109 = vmatprep.subr.mxu0 0.0
  %2110 = vmatpush1.xpose.msra.mxu0 %v487
  %2111 = vmatprep.subr.mxu0 0.0
  %2112 = vmatpush1.xpose.msra.mxu0 %v484
  %2113 = vmatprep.subr.mxu0 0.0
  %2114 = vmatpush1.xpose.msra.mxu0 %v481
  %2115 = vmatprep.subr.mxu0 0.0
  %2116 = vmatpush1.xpose.msra.mxu0 %v478
  %2117 = vmatprep.subr.mxu0 0.0
  %2118 = vmatpush1.xpose.msra.mxu0 %v475
  %2119 = vmatprep.subr.mxu0 0.0
  %2120 = vmatpush1.xpose.msra.mxu0 %v472
  %2121 = vmatprep.subr.mxu0 0.0
  %2122 = vmatpush1.xpose.msra.mxu0 %v469
  %2123 = vmatprep.subr.mxu0 0.0
  %2124 = vmatpush1.xpose.msra.mxu0 %v466
  %2125 = vmatprep.subr.mxu0 0.0
  %2126 = vmatpush1.xpose.msra.mxu0 %v463
  %2127 = vmatprep.subr.mxu0 0.0
  %2128 = vmatpush1.xpose.msra.mxu0 %v460
  %2129 = vmatprep.subr.mxu0 0.0
  %2130 = vmatpush1.xpose.msra.mxu0 %v457
  %2131 = vmatprep.subr.mxu0 0.0
  %2132 = vmatpush1.xpose.msra.mxu0 %v454
  %2133 = vmatprep.subr.mxu0 0.0
  %2134 = vmatpush1.xpose.msra.mxu0 %v451
  %2135 = vmatprep.subr.mxu0 0.0
  %2136 = vmatpush2.xpose.msra.mxu0 0.0
  %2137 = vmatprep.subr.mxu0 0.0
  %2138 = vmatpush2.xpose.msra.mxu0 0.0
  %2139 = vmatprep.subr.mxu0 0.0
  %2140 = vmatpush2.xpose.msra.mxu0 0.0
  %2141 = vmatprep.subr.mxu0 0.0
  %2142 = vmatpush2.xpose.msra.mxu0 0.0
  %2143 = vmatprep.subr.mxu0 0.0
  %2144 = vmatpush2.xpose.msra.mxu0 0.0
  %2145 = vmatprep.subr.mxu0 0.0
  %2146 = vmatpush2.xpose.msra.mxu0 0.0
  %2147 = vmatprep.subr.mxu0 0.0
  %2148 = vmatpush2.xpose.msra.mxu0 0.0
  %2149 = vmatprep.subr.mxu0 0.0
  %2150 = vmatpush2.xpose.msra.mxu0 0.0
  %2151 = vmatprep.subr.mxu0 0.0
  %2152 = vmatpush2.xpose.msra.mxu0 0.0
  %2153 = vmatprep.subr.mxu0 0.0
  %2154 = vmatpush2.xpose.msra.mxu0 0.0
  %2155 = vmatprep.subr.mxu0 0.0
  %2156 = vmatpush2.xpose.msra.mxu0 0.0
  %2157 = vmatprep.subr.mxu0 0.0
  %2158 = vmatpush2.xpose.msra.mxu0 0.0
  %2159 = vmatprep.subr.mxu0 0.0
  %2160 = vmatpush2.xpose.msra.mxu0 0.0
  %2161 = vmatprep.subr.mxu0 0.0
  %2162 = vmatpush2.xpose.msra.mxu0 0.0
  %2163 = vmatprep.subr.mxu0 0.0
  %2164 = vmatpush2.xpose.msra.mxu0 0.0
  %2165 = vmatprep.subr.mxu0 0.0
  %2166 = vmatpush2.xpose.msra.mxu0 0.0
  %2167 = vmatprep.mubr.f32.mxu0 0.0
  %2168 = vmatmul.mubr.f32.gmra.mxu0 %v2101
  %v2169 = vpop.f32.mrf.mxu0
  %v2170 = vadd.f32 0.0, %v2169
  %v2171 = vpop.f32.mrf.mxu0
  %2172 = vdwg.mxu0
  %v2173 = vadd.f32 %v413, %v2170
  %v2174 = vxor.u32 %v2173, 2147483648
  %v2175 = vmul.f32 %v2174, 1.442695
  %v2176 = vpow.pop %v2175
  %v2177 = vadd.f32 %v2176, 1.0
  %v2178 = vrcp.pop %v2177
  %v2179 = vmul.f32 1.0, %v2178
  %v2180 = vtanh.pop %v2173
  %v2181 = vmul.f32 %v2179, %v2084
  %2183 = vrot.lane.b32.xlu0 %v2180, 64
  %v2184 = vpop.permute.xlu0 %2183
  %v2186 = vmul.f32 %v2179, %v2184
  %2188 = vrot.lane.b32.xlu0 %v2186, 32
  %v2189 = vpop.permute.xlu0 %2188
  %v2191 = vadd.f32 %v2181, %v2189
  %v2192 = vtanh.pop %v2191
  %2194 = vrot.lane.b32.xlu0 %v2192, 64
  %v2195 = vpop.permute.xlu0 %2194
  %v2197 = vmul.f32 %v2179, %v2195
  %v2198 = vld [vmem:[%s4] sm:$0x1]
  %v2200 = vlaneseq
  %v2201 = vshrl.u32 %v2200, 7
  %v2202 = vsub.s32 0, %v2201
  %v2203 = vrot.slane %v2198, %v2202
  %v2205 = vunpack.c.l.s4 1983009808
  %v2206 = vunpack.c.0.s8 %v2205
  %v2207 = vlaneseq
  %v2208 = vshrl.u32 %v2207, 7
  %v2209 = vsub.s32 %v2206, %v2208
  %v2210 = vrot.slane %v2203, %v2209
  %2211 = vrot.lane.b32.xlu0 %v2210, 96
  %v2212 = vpop.permute.xlu0 %2211
  %v2214 = vmul.f32 %v2197, %v2212
  %v2217 = vunpack.c.l.s4 1983009808
  %v2218 = vunpack.c.0.s8 %v2217
  %v2219 = vlaneseq
  %v2220 = vshrl.u32 %v2219, 7
  %v2221 = vsub.s32 %v2218, %v2220
  %v2222 = vrot.slane %v2214, %v2221
  %2223 = vrot.lane.b32.xlu0 %v2222, 32
  %v2224 = vpop.permute.xlu0 %2223
  %vm2226 = vcmask 254976
  %v2227 = vsel %vm2226, %v2224, 0.0
  %2228 = vadd.xlane.f32.xlu0 %v2227
  %v2229 = vpop.xlane.xlu0 %2228
  %s2230 = sld [smem:[#allocation2]]
  %v2231 = vstv %s2230
  %v2232 = vadd.f32 %v2229, %v2231
  %vm2233 = vcmask 1024
  %2234 = vst.msk [vmem:[%s6] sm:$0x3] %vm2233, %v2232
  // Predicated region
  $region26: #{tpu_custom_call.1} parent=0 // pred_check
    _
  $region27: #{tpu_custom_call.1} parent=0 // pred_check_branch
    %2236 = sbr.rel (0) target = $region29
  $region28: #{tpu_custom_call.1} parent=0 // pred_region
    _
  $region29: #{tpu_custom_call.1} parent=0 // pred_fallthru
    _
  // Predicated region
  $region30: #{tpu_custom_call.1} parent=0 // pred_check
    _
  $region31: #{tpu_custom_call.1} parent=0 // pred_check_branch
    %2238 = sbr.rel (0) target = $region33
  $region32: #{tpu_custom_call.1} parent=0 // pred_region
    _
  $region33: #{tpu_custom_call.1} parent=0 // pred_fallthru
    _

</llo_original>
